<compile_context>
chip_gen: v7x
topology: tpu7x:2x2x1
jax: 0.10.0
libtpu: 0.0.40
codegen_flags: <defaults>
</compile_context>

<pallas_src>
import functools

import jax
import jax.numpy as jnp
import numpy as np
from jax.experimental import pallas as pl
from jax.experimental.pallas import tpu as pltpu


def _round_up(x, m):
    return ((x + m - 1) // m) * m


def _elu(x):
    # ELU(alpha=1): x if x > 0 else exp(x) - 1 (exp runs on the EUP slot; inf from
    # exp of large positives is discarded by the select, so no pre-clamp needed).
    return jnp.where(x > 0, x, jnp.exp(x) - 1.0)


def _softplus(x):
    # Numerically stable softplus: max(x, 0) + log1p(exp(-|x|)).  Keeps garbage rows
    # from the ragged last block finite (they are dropped at writeback anyway).
    return jnp.maximum(x, 0.0) + jnp.log1p(jnp.exp(-jnp.abs(x)))


# dot_general dims: contract lhs dim 1 with rhs dim 1 (i.e. W @ x.T without
# materializing a transpose — same pattern as attention's q @ k.T).
_NT_DIMS = (((1,), (1,)), ((), ()))


def _std_mlp_kernel(*refs, n_act_layers, min_std, max_std, sub_batch):
    # refs = (x_ref, W0, b0, W1, b1, ..., W_last, b_last, std_ref)
    #   x_ref:   [TB, feat]  f32  natural (batch-major) layout straight from HBM
    #   W_i:     [out, in]   f32  torch nn.Linear layout
    #   b_i:     [out, 1]    f32  broadcast over the lane/batch axis
    #   std_ref: [feat, TB]        lane-dense (batch-in-lanes) store
    x_ref = refs[0]
    param_refs = refs[1:-1]
    std_ref = refs[-1]

    tb = x_ref.shape[0]
    # Statically-unrolled sub-chunks along the batch/lane axis: independent
    # matmul->ELU chains let the scheduler overlap MXU with VPU/EUP work.
    for start in range(0, tb, sub_batch):
        size = min(sub_batch, tb - start)  # multiple of 128 by construction
        x_c = x_ref[pl.ds(start, size), :]                       # [size, feat] f32

        # Layer 0: fold the batch-major -> batch-in-lanes "transpose" into the matmul.
        w0 = param_refs[0][...]
        b0 = param_refs[1][...]
        h = jax.lax.dot_general(w0, x_c, _NT_DIMS,
                                preferred_element_type=jnp.float32) + b0  # [hid, size]
        h = _elu(h)

        # Remaining hidden layers: canonical W @ h (batch stays on lanes, dense vregs).
        for li in range(1, n_act_layers):
            w = param_refs[2 * li][...]
            b = param_refs[2 * li + 1][...]
            h = _elu(jnp.dot(w, h, preferred_element_type=jnp.float32) + b)

        # Final Linear (no activation) + softplus + clamp, lane-dense store.
        w_l = param_refs[-2][...]
        b_l = param_refs[-1][...]
        raw = jnp.dot(w_l, h, preferred_element_type=jnp.float32) + b_l   # [feat, size]
        std_c = jnp.clip(_softplus(raw), min_std, max_std)
        std_ref[:, pl.ds(start, size)] = std_c.astype(std_ref.dtype)


def model_normal_std_forward(features, params, min_std=0.0001, max_std=10.0,
                             block_batch=4096, sub_batch=512,
                             out_dtype=jnp.float32):
    """ModelNormalStd forward with a Pallas TPU kernel.

    features: [..., feature_size] float array
    params:   [(W0, b0), ..., (W_last, b_last)] with W_i in torch layout [out, in]
    returns:  (mean, std) — the parameters of Independent(Normal(mean, std), 1);
              mean == features (per the module), std has the same shape as features.
    """
    feat = features.shape[-1]
    batch_dims = features.shape[:-1]
    n_act_layers = len(params) - 1

    x2d = features.reshape(-1, feat).astype(jnp.float32)   # natural layout, no HBM pass
    B = x2d.shape[0]

    # Batch tile: multiple of 128 (lane-dense), at most block_batch, and capped at
    # ~ceil(B/2) so the "parallel" grid has >= 2 steps for v7x megacore sharding.
    half = _round_up(pl.cdiv(B, 2), 128)
    TB = max(128, min(_round_up(block_batch, 128), half))
    sub_batch = max(128, _round_up(min(sub_batch, TB), 128))
    num_blocks = pl.cdiv(B, TB)   # ragged last block is fine: no jnp.pad HBM copy

    # Params: weights f32 in torch layout [out, in]; biases f32 as [out, 1].
    flat_params = []
    for (w, b) in params:
        flat_params.append(jnp.asarray(w, jnp.float32))
        flat_params.append(jnp.asarray(b, jnp.float32).reshape(-1, 1))

    kernel = functools.partial(
        _std_mlp_kernel,
        n_act_layers=n_act_layers,
        min_std=min_std,
        max_std=max_std,
        sub_batch=sub_batch,
    )

    x_spec = pl.BlockSpec((TB, feat), lambda i: (i, 0))
    param_specs = [pl.BlockSpec(p.shape, lambda i: (0, 0)) for p in flat_params]
    out_spec = pl.BlockSpec((feat, TB), lambda i: (0, i))

    std_t = pl.pallas_call(
        kernel,
        grid=(num_blocks,),
        in_specs=[x_spec] + param_specs,
        out_specs=out_spec,
        out_shape=jax.ShapeDtypeStruct((feat, B), out_dtype),
        compiler_params=pltpu.CompilerParams(
            dimension_semantics=("parallel",)),   # megacore sharding on v7x
    )(x2d, *flat_params)

    # Single fused XLA copy (transpose + reshape).  Kept outside the kernel so the
    # std store stays lane-dense (safest for v5e's single vector-store slot); pass
    # out_dtype=bf16 to halve these bytes if downstream tolerates it.
    std = std_t.T.reshape(batch_dims + (feat,)).astype(jnp.float32)
    mean = features   # Normal(features, std): the mean is the input itself
    # TODO(synk): td.Independent(td.Normal(mean, std), 1) has no Pallas/array
    # equivalent; we return its parameters (mean, std), which fully determine it.
    return mean, std


def init_params(key, feature_size, hidden_size, layers):
    """Parameter init matching the torch module's layer shapes (torch layout [out, in])."""
    dims = [feature_size] + [hidden_size] * layers + [feature_size]
    params = []
    for i in range(len(dims) - 1):
        key, kw, kb = jax.random.split(key, 3)
        fan_in = dims[i]
        scale = 1.0 / np.sqrt(fan_in)
        w = jax.random.uniform(kw, (dims[i + 1], dims[i]), jnp.float32, -scale, scale)
        b = jax.random.uniform(kb, (dims[i + 1],), jnp.float32, -scale, scale)
        params.append((w, b))
    return params


def reference_forward(features, params, min_std=0.0001, max_std=10.0):
    """Pure-JAX f32 reference of the torch module's forward."""
    feat = features.shape[-1]
    h = features.reshape(-1, feat)
    for (w, b) in params[:-1]:
        h = jax.nn.elu(h @ w.T + b)
    w, b = params[-1]
    raw = h @ w.T + b
    std = jnp.clip(jax.nn.softplus(raw), min_std, max_std)
    return features, std.reshape(features.shape)


if __name__ == "__main__":
    # Small config consistent with the module: feature_size=32, hidden_size=32, layers=2.
    feature_size = 32
    hidden_size = 32
    layers = 2

    key = jax.random.PRNGKey(0)
    key, kx = jax.random.split(key)
    # features: [batch=4, seq=128, feature_size] -> 512 rows.  With block_batch=256 /
    # sub_batch=128 this exercises 2 parallel grid blocks and 2 sub-chunks per block.
    features = jax.random.normal(kx, (4, 128, feature_size), jnp.float32)

    params = init_params(key, feature_size, hidden_size, layers)

    mean, std = model_normal_std_forward(features, params,
                                         block_batch=256, sub_batch=128)
    jax.block_until_ready((mean, std))

    mean_want, std_want = reference_forward(features, params)

    assert mean.shape == features.shape
    assert std.shape == features.shape
    assert bool(jnp.all(mean == features))
    assert bool(jnp.all(std >= 0.0001 - 1e-7)) and bool(jnp.all(std <= 10.0 + 1e-7))
    # f32 end-to-end; tolerance kept generous in case the MXU default precision
    # uses reduced-precision passes on some generations.
    max_err = float(jnp.max(jnp.abs(std - std_want)))
    assert max_err < 2e-2, f"std mismatch vs reference: max abs err {max_err}"

    print("KERNEL_OK")
</pallas_src>

<mosaic_0001>
module attributes {stable_mosaic.version = 11 : i64} {
  func.func @_std_mlp_kernel(%arg0: i32, %arg1: memref<256x32xf32, #tpu.memory_space<vmem>>, %arg2: memref<32x32xf32, #tpu.memory_space<vmem>>, %arg3: memref<32x1xf32, #tpu.memory_space<vmem>>, %arg4: memref<32x32xf32, #tpu.memory_space<vmem>>, %arg5: memref<32x1xf32, #tpu.memory_space<vmem>>, %arg6: memref<32x32xf32, #tpu.memory_space<vmem>>, %arg7: memref<32x1xf32, #tpu.memory_space<vmem>>, %arg8: memref<32x256xf32, #tpu.memory_space<vmem>>) attributes {dimension_semantics = [#tpu.dimension_semantics<parallel>], iteration_bounds = array<i64: 2>, scalar_prefetch = 0 : i64, scratch_operands = 0 : i64, tpu.core_type = #tpu.core_type<tc>, window_params = [{transform_indices = @transform_0, window_bounds = array<i64: 256, 32>}, {pipeline_mode = #tpu.pipeline_mode<synchronous>, transform_indices = @transform_1, window_bounds = array<i64: 32, 32>}, {pipeline_mode = #tpu.pipeline_mode<synchronous>, transform_indices = @transform_2, window_bounds = array<i64: 32, 1>}, {pipeline_mode = #tpu.pipeline_mode<synchronous>, transform_indices = @transform_3, window_bounds = array<i64: 32, 32>}, {pipeline_mode = #tpu.pipeline_mode<synchronous>, transform_indices = @transform_4, window_bounds = array<i64: 32, 1>}, {pipeline_mode = #tpu.pipeline_mode<synchronous>, transform_indices = @transform_5, window_bounds = array<i64: 32, 32>}, {pipeline_mode = #tpu.pipeline_mode<synchronous>, transform_indices = @transform_6, window_bounds = array<i64: 32, 1>}, {transform_indices = @transform_7, window_bounds = array<i64: 32, 256>}]} {
    %c0 = arith.constant 0 : index
    %c0_0 = arith.constant 0 : index
    %0 = vector.load %arg1[%c0, %c0_0] : memref<256x32xf32, #tpu.memory_space<vmem>>, vector<128x32xf32>
    %c0_1 = arith.constant 0 : index
    %c0_2 = arith.constant 0 : index
    %1 = vector.load %arg2[%c0_1, %c0_2] : memref<32x32xf32, #tpu.memory_space<vmem>>, vector<32x32xf32>
    %c0_3 = arith.constant 0 : index
    %c0_4 = arith.constant 0 : index
    %2 = vector.load %arg3[%c0_3, %c0_4] : memref<32x1xf32, #tpu.memory_space<vmem>>, vector<32x1xf32>
    %cst = arith.constant dense<0.000000e+00> : vector<32x128xf32>
    %3 = tpu.matmul %1, %0, %cst {dimension_numbers = #tpu.dot_dimension_numbers<[1], [1], [0], [0], [0, 0, 1, 0], [], []>} : vector<32x32xf32>, vector<128x32xf32>, vector<32x128xf32> -> vector<32x128xf32>
    %4 = vector.broadcast %2 : vector<32x1xf32> to vector<32x128xf32>
    %5 = arith.addf %3, %4 : vector<32x128xf32>
    %cst_5 = arith.constant 0.000000e+00 : f32
    %6 = vector.broadcast %cst_5 : f32 to vector<32x128xf32>
    %7 = arith.cmpf ogt, %5, %6 : vector<32x128xf32>
    %8 = math.exp %5 : vector<32x128xf32>
    %cst_6 = arith.constant 1.000000e+00 : f32
    %9 = vector.broadcast %cst_6 : f32 to vector<32x128xf32>
    %10 = arith.subf %8, %9 : vector<32x128xf32>
    %11 = arith.select %7, %5, %10 : vector<32x128xi1>, vector<32x128xf32>
    %c0_7 = arith.constant 0 : index
    %c0_8 = arith.constant 0 : index
    %12 = vector.load %arg4[%c0_7, %c0_8] : memref<32x32xf32, #tpu.memory_space<vmem>>, vector<32x32xf32>
    %c0_9 = arith.constant 0 : index
    %c0_10 = arith.constant 0 : index
    %13 = vector.load %arg5[%c0_9, %c0_10] : memref<32x1xf32, #tpu.memory_space<vmem>>, vector<32x1xf32>
    %cst_11 = arith.constant dense<0.000000e+00> : vector<32x128xf32>
    %14 = tpu.matmul %12, %11, %cst_11 {dimension_numbers = #tpu.dot_dimension_numbers<[1], [0], [0], [1], [0, 0, 1, 1], [], []>} : vector<32x32xf32>, vector<32x128xf32>, vector<32x128xf32> -> vector<32x128xf32>
    %15 = vector.broadcast %13 : vector<32x1xf32> to vector<32x128xf32>
    %16 = arith.addf %14, %15 : vector<32x128xf32>
    %cst_12 = arith.constant 0.000000e+00 : f32
    %17 = vector.broadcast %cst_12 : f32 to vector<32x128xf32>
    %18 = arith.cmpf ogt, %16, %17 : vector<32x128xf32>
    %19 = math.exp %16 : vector<32x128xf32>
    %cst_13 = arith.constant 1.000000e+00 : f32
    %20 = vector.broadcast %cst_13 : f32 to vector<32x128xf32>
    %21 = arith.subf %19, %20 : vector<32x128xf32>
    %22 = arith.select %18, %16, %21 : vector<32x128xi1>, vector<32x128xf32>
    %c0_14 = arith.constant 0 : index
    %c0_15 = arith.constant 0 : index
    %23 = vector.load %arg6[%c0_14, %c0_15] : memref<32x32xf32, #tpu.memory_space<vmem>>, vector<32x32xf32>
    %c0_16 = arith.constant 0 : index
    %c0_17 = arith.constant 0 : index
    %24 = vector.load %arg7[%c0_16, %c0_17] : memref<32x1xf32, #tpu.memory_space<vmem>>, vector<32x1xf32>
    %cst_18 = arith.constant dense<0.000000e+00> : vector<32x128xf32>
    %25 = tpu.matmul %23, %22, %cst_18 {dimension_numbers = #tpu.dot_dimension_numbers<[1], [0], [0], [1], [0, 0, 1, 1], [], []>} : vector<32x32xf32>, vector<32x128xf32>, vector<32x128xf32> -> vector<32x128xf32>
    %26 = vector.broadcast %24 : vector<32x1xf32> to vector<32x128xf32>
    %27 = arith.addf %25, %26 : vector<32x128xf32>
    %cst_19 = arith.constant 0.000000e+00 : f32
    %28 = vector.broadcast %cst_19 : f32 to vector<32x128xf32>
    %29 = arith.maximumf %27, %28 : vector<32x128xf32>
    %30 = math.absf %27 : vector<32x128xf32>
    %cst_20 = arith.constant 0.000000e+00 : f32
    %31 = vector.broadcast %cst_20 : f32 to vector<32x128xf32>
    %32 = arith.subf %31, %30 : vector<32x128xf32>
    %33 = math.exp %32 : vector<32x128xf32>
    %34 = math.log1p %33 : vector<32x128xf32>
    %35 = arith.addf %29, %34 : vector<32x128xf32>
    %cst_21 = arith.constant 9.99999974E-5 : f32
    %cst_22 = arith.constant 1.000000e+01 : f32
    %36 = vector.broadcast %cst_21 : f32 to vector<32x128xf32>
    %37 = arith.maximumf %36, %35 : vector<32x128xf32>
    %38 = vector.broadcast %cst_22 : f32 to vector<32x128xf32>
    %39 = arith.minimumf %38, %37 : vector<32x128xf32>
    %c0_23 = arith.constant 0 : index
    %c0_24 = arith.constant 0 : index
    %40 = vector.load %arg8[%c0_23, %c0_24] : memref<32x256xf32, #tpu.memory_space<vmem>>, vector<32x128xf32>
    tpu.vector_store %arg8[%c0_23, %c0_24], %39 {strides = array<i32>} : memref<32x256xf32, #tpu.memory_space<vmem>>, vector<32x128xf32>,
    %c128 = arith.constant 128 : index
    %c0_25 = arith.constant 0 : index
    %41 = vector.load %arg1[%c128, %c0_25] : memref<256x32xf32, #tpu.memory_space<vmem>>, vector<128x32xf32>
    %c0_26 = arith.constant 0 : index
    %c0_27 = arith.constant 0 : index
    %42 = vector.load %arg2[%c0_26, %c0_27] : memref<32x32xf32, #tpu.memory_space<vmem>>, vector<32x32xf32>
    %c0_28 = arith.constant 0 : index
    %c0_29 = arith.constant 0 : index
    %43 = vector.load %arg3[%c0_28, %c0_29] : memref<32x1xf32, #tpu.memory_space<vmem>>, vector<32x1xf32>
    %cst_30 = arith.constant dense<0.000000e+00> : vector<32x128xf32>
    %44 = tpu.matmul %42, %41, %cst_30 {dimension_numbers = #tpu.dot_dimension_numbers<[1], [1], [0], [0], [0, 0, 1, 0], [], []>} : vector<32x32xf32>, vector<128x32xf32>, vector<32x128xf32> -> vector<32x128xf32>
    %45 = vector.broadcast %43 : vector<32x1xf32> to vector<32x128xf32>
    %46 = arith.addf %44, %45 : vector<32x128xf32>
    %cst_31 = arith.constant 0.000000e+00 : f32
    %47 = vector.broadcast %cst_31 : f32 to vector<32x128xf32>
    %48 = arith.cmpf ogt, %46, %47 : vector<32x128xf32>
    %49 = math.exp %46 : vector<32x128xf32>
    %cst_32 = arith.constant 1.000000e+00 : f32
    %50 = vector.broadcast %cst_32 : f32 to vector<32x128xf32>
    %51 = arith.subf %49, %50 : vector<32x128xf32>
    %52 = arith.select %48, %46, %51 : vector<32x128xi1>, vector<32x128xf32>
    %c0_33 = arith.constant 0 : index
    %c0_34 = arith.constant 0 : index
    %53 = vector.load %arg4[%c0_33, %c0_34] : memref<32x32xf32, #tpu.memory_space<vmem>>, vector<32x32xf32>
    %c0_35 = arith.constant 0 : index
    %c0_36 = arith.constant 0 : index
    %54 = vector.load %arg5[%c0_35, %c0_36] : memref<32x1xf32, #tpu.memory_space<vmem>>, vector<32x1xf32>
    %cst_37 = arith.constant dense<0.000000e+00> : vector<32x128xf32>
    %55 = tpu.matmul %53, %52, %cst_37 {dimension_numbers = #tpu.dot_dimension_numbers<[1], [0], [0], [1], [0, 0, 1, 1], [], []>} : vector<32x32xf32>, vector<32x128xf32>, vector<32x128xf32> -> vector<32x128xf32>
    %56 = vector.broadcast %54 : vector<32x1xf32> to vector<32x128xf32>
    %57 = arith.addf %55, %56 : vector<32x128xf32>
    %cst_38 = arith.constant 0.000000e+00 : f32
    %58 = vector.broadcast %cst_38 : f32 to vector<32x128xf32>
    %59 = arith.cmpf ogt, %57, %58 : vector<32x128xf32>
    %60 = math.exp %57 : vector<32x128xf32>
    %cst_39 = arith.constant 1.000000e+00 : f32
    %61 = vector.broadcast %cst_39 : f32 to vector<32x128xf32>
    %62 = arith.subf %60, %61 : vector<32x128xf32>
    %63 = arith.select %59, %57, %62 : vector<32x128xi1>, vector<32x128xf32>
    %c0_40 = arith.constant 0 : index
    %c0_41 = arith.constant 0 : index
    %64 = vector.load %arg6[%c0_40, %c0_41] : memref<32x32xf32, #tpu.memory_space<vmem>>, vector<32x32xf32>
    %c0_42 = arith.constant 0 : index
    %c0_43 = arith.constant 0 : index
    %65 = vector.load %arg7[%c0_42, %c0_43] : memref<32x1xf32, #tpu.memory_space<vmem>>, vector<32x1xf32>
    %cst_44 = arith.constant dense<0.000000e+00> : vector<32x128xf32>
    %66 = tpu.matmul %64, %63, %cst_44 {dimension_numbers = #tpu.dot_dimension_numbers<[1], [0], [0], [1], [0, 0, 1, 1], [], []>} : vector<32x32xf32>, vector<32x128xf32>, vector<32x128xf32> -> vector<32x128xf32>
    %67 = vector.broadcast %65 : vector<32x1xf32> to vector<32x128xf32>
    %68 = arith.addf %66, %67 : vector<32x128xf32>
    %cst_45 = arith.constant 0.000000e+00 : f32
    %69 = vector.broadcast %cst_45 : f32 to vector<32x128xf32>
    %70 = arith.maximumf %68, %69 : vector<32x128xf32>
    %71 = math.absf %68 : vector<32x128xf32>
    %cst_46 = arith.constant 0.000000e+00 : f32
    %72 = vector.broadcast %cst_46 : f32 to vector<32x128xf32>
    %73 = arith.subf %72, %71 : vector<32x128xf32>
    %74 = math.exp %73 : vector<32x128xf32>
    %75 = math.log1p %74 : vector<32x128xf32>
    %76 = arith.addf %70, %75 : vector<32x128xf32>
    %cst_47 = arith.constant 9.99999974E-5 : f32
    %cst_48 = arith.constant 1.000000e+01 : f32
    %77 = vector.broadcast %cst_47 : f32 to vector<32x128xf32>
    %78 = arith.maximumf %77, %76 : vector<32x128xf32>
    %79 = vector.broadcast %cst_48 : f32 to vector<32x128xf32>
    %80 = arith.minimumf %79, %78 : vector<32x128xf32>
    %c0_49 = arith.constant 0 : index
    %c128_50 = arith.constant 128 : index
    %81 = vector.load %arg8[%c0_49, %c128_50] : memref<32x256xf32, #tpu.memory_space<vmem>>, vector<32x128xf32>
    tpu.vector_store %arg8[%c0_49, %c128_50], %80 {strides = array<i32>} : memref<32x256xf32, #tpu.memory_space<vmem>>, vector<32x128xf32>,
    return
  }
  func.func @transform_0(%arg0: i32) -> (i32, i32) {
    %c0_i32 = arith.constant 0 : i32
    %c0_i32_0 = arith.constant 0 : i32
    return %arg0, %c0_i32 : i32, i32
  }
  func.func @transform_1(%arg0: i32) -> (i32, i32) {
    %c0_i32 = arith.constant 0 : i32
    %c0_i32_0 = arith.constant 0 : i32
    %c0_i32_1 = arith.constant 0 : i32
    return %c0_i32, %c0_i32_0 : i32, i32
  }
  func.func @transform_2(%arg0: i32) -> (i32, i32) {
    %c0_i32 = arith.constant 0 : i32
    %c0_i32_0 = arith.constant 0 : i32
    %c0_i32_1 = arith.constant 0 : i32
    return %c0_i32, %c0_i32_0 : i32, i32
  }
  func.func @transform_3(%arg0: i32) -> (i32, i32) {
    %c0_i32 = arith.constant 0 : i32
    %c0_i32_0 = arith.constant 0 : i32
    %c0_i32_1 = arith.constant 0 : i32
    return %c0_i32, %c0_i32_0 : i32, i32
  }
  func.func @transform_4(%arg0: i32) -> (i32, i32) {
    %c0_i32 = arith.constant 0 : i32
    %c0_i32_0 = arith.constant 0 : i32
    %c0_i32_1 = arith.constant 0 : i32
    return %c0_i32, %c0_i32_0 : i32, i32
  }
  func.func @transform_5(%arg0: i32) -> (i32, i32) {
    %c0_i32 = arith.constant 0 : i32
    %c0_i32_0 = arith.constant 0 : i32
    %c0_i32_1 = arith.constant 0 : i32
    return %c0_i32, %c0_i32_0 : i32, i32
  }
  func.func @transform_6(%arg0: i32) -> (i32, i32) {
    %c0_i32 = arith.constant 0 : i32
    %c0_i32_0 = arith.constant 0 : i32
    %c0_i32_1 = arith.constant 0 : i32
    return %c0_i32, %c0_i32_0 : i32, i32
  }
  func.func @transform_7(%arg0: i32) -> (i32, i32) {
    %c0_i32 = arith.constant 0 : i32
    %c0_i32_0 = arith.constant 0 : i32
    return %c0_i32, %arg0 : i32, i32
  }
}

</mosaic_0001>

<llo_original>
// kernel: tpu_custom_call.1
$region0: #{tpu_custom_call.1}
  #allocation0 [shape = 'u32[]', space=smem, size = 0x4, offset = 0x4, fixed_abs, tag = 'smem constant byte address 0x4 - core index']
  #allocation1 [shape = 'u32[144,128]{1,0:T(1,128)}', space=vmem, size = 0x12000, scoped, tag = 'internal scratch']
  %s0 = inlined_call_operand.vmem [shape: f32[512,32], index: 0, kind: input, shape index: {}]
  %s1 = inlined_call_operand.vmem [shape: f32[32,32], index: 1, kind: input, shape index: {}]
  %s2 = inlined_call_operand.vmem [shape: f32[32,1], index: 2, kind: input, shape index: {}]
  %s3 = inlined_call_operand.vmem [shape: f32[32,32], index: 3, kind: input, shape index: {}]
  %s4 = inlined_call_operand.vmem [shape: f32[32,1], index: 4, kind: input, shape index: {}]
  %s5 = inlined_call_operand.vmem [shape: f32[32,32], index: 5, kind: input, shape index: {}]
  %s6 = inlined_call_operand.vmem [shape: f32[32,1], index: 6, kind: input, shape index: {}]
  %s7 = inlined_call_operand.hbm [shape: f32[32,512], index: 7, kind: output, shape index: {}]
  %s8 = sld [smem:[#allocation0]]
  $region61: #{tpu_custom_call.1} parent=0
    _
  %s10 = ssub.s32 1, %s8
  %s11 = scalar_select 0, %s10, %s8
  $region1: #{tpu_custom_call.1} parent=0
    #allocation2 [shape = 'u8[65536]{0}', space=vmem, size = 0x10000, scoped, tag = 'output window, operand 0']
    #allocation3 [shape = 's32[2]{0}', space=sflag, size = 0x8, scoped, tag = 'scoped memory for tpu_custom_call.1']
    %12 = vsyncpa [#allocation3], 0
    %s13 = scalar_lea.sflag [#allocation3], 1
    %14 = vsyncpa %s13, 0
    loop: start=0, step=1, limit=4
    $region2: #{tpu_custom_call.1} parent=1 // loop_pre_header
      _
    $region3: #{tpu_custom_call.1} parent=1 // loop_header
      %s16 = sphi 0, %s20
      %p17 = scmp.ge.s32.totalorder %s16, 4
      %s26 = sphi 0, %s28
      %s29 = sphi 0, %s26
      %s30 = sphi 0, %s29
      %s46 = sphi 0, %s30
      %s50 = sphi 0, %s50
      %s52 = sphi 0, %s50
      %s53 = sphi 0, %s52
      %s67 = sphi 0, %s53
      %s71 = sphi 0, %s71
      %s73 = sphi 0, %s71
      %s74 = sphi 0, %s73
      %s88 = sphi 0, %s74
      %s92 = sphi 0, %s92
      %s94 = sphi 0, %s92
      %s95 = sphi 0, %s94
      %s109 = sphi 0, %s95
      %s113 = sphi 0, %s113
      %s115 = sphi 0, %s113
      %s116 = sphi 0, %s115
      %s130 = sphi 0, %s116
      %s134 = sphi 0, %s134
      %s136 = sphi 0, %s134
      %s137 = sphi 0, %s136
      %s151 = sphi 0, %s137
      %s155 = sphi 0, %s155
      %s157 = sphi 0, %s155
      %s158 = sphi 0, %s157
      %s172 = sphi 0, %s158
      %s178 = sphi 0, %s180
      %s181 = sphi 0, %s178
      %s182 = sphi 0, %s181
      %s198 = sphi 0, %s182
    $region4: #{tpu_custom_call.1} parent=1 // loop_header_branch
      %19 = sbr.rel (%p17) target = $region8
    $region5: #{tpu_custom_call.1} parent=1 // loop_body
      %s21 = ssub.s32 %s16, 1
      %s22 = ssub.s32 %s16, 2
      %s23 = sadd.s32 %s16, 1
      %s24 = ssub.s32 %s16, %s23
      %p25 = scmp.eq.s32.totalorder %s24, 0
      %s27 = sadd.s32 %s26, 1
      %s28 = scalar_select %p25, %s26, %s27
      %p31 = pneg %p25
      %p32 = scmp.eq.s32.totalorder %s16, 1
      %p33 = por %p31, %p32
      %p34 = scmp.ne.s32.totalorder %s26, %s29
      %p35 = scmp.eq.s32.totalorder %s16, 0
      %p36 = por %p34, %p35
      %p37 = scmp.ne.s32.totalorder %s26, %s29
      %p38 = scmp.eq.s32.totalorder %s21, 1
      %p39 = por %p37, %p38
      %p40 = scmp.ne.s32.totalorder %s29, %s30
      %p41 = scmp.eq.s32.totalorder %s21, 0
      %p42 = por %p40, %p41
      %p43 = scmp.ne.s32.totalorder %s29, %s30
      %p44 = scmp.eq.s32.totalorder %s22, 1
      %p45 = por %p43, %p44
      %p47 = scmp.ne.s32.totalorder %s30, %s46
      %p48 = scmp.eq.s32.totalorder %s22, 0
      %p49 = por %p47, %p48
      %s51 = sadd.s32 %s50, 1
      %p54 = scmp.eq.s32.totalorder %s16, 1
      %p55 = scmp.ne.s32.totalorder %s50, %s52
      %p56 = scmp.eq.s32.totalorder %s16, 0
      %p57 = por %p55, %p56
      %p58 = scmp.ne.s32.totalorder %s50, %s52
      %p59 = scmp.eq.s32.totalorder %s21, 1
      %p60 = por %p58, %p59
      %p61 = scmp.ne.s32.totalorder %s52, %s53
      %p62 = scmp.eq.s32.totalorder %s21, 0
      %p63 = por %p61, %p62
      %p64 = scmp.ne.s32.totalorder %s52, %s53
      %p65 = scmp.eq.s32.totalorder %s22, 1
      %p66 = por %p64, %p65
      %p68 = scmp.ne.s32.totalorder %s53, %s67
      %p69 = scmp.eq.s32.totalorder %s22, 0
      %p70 = por %p68, %p69
      %s72 = sadd.s32 %s71, 1
      %p75 = scmp.eq.s32.totalorder %s16, 1
      %p76 = scmp.ne.s32.totalorder %s71, %s73
      %p77 = scmp.eq.s32.totalorder %s16, 0
      %p78 = por %p76, %p77
      %p79 = scmp.ne.s32.totalorder %s71, %s73
      %p80 = scmp.eq.s32.totalorder %s21, 1
      %p81 = por %p79, %p80
      %p82 = scmp.ne.s32.totalorder %s73, %s74
      %p83 = scmp.eq.s32.totalorder %s21, 0
      %p84 = por %p82, %p83
      %p85 = scmp.ne.s32.totalorder %s73, %s74
      %p86 = scmp.eq.s32.totalorder %s22, 1
      %p87 = por %p85, %p86
      %p89 = scmp.ne.s32.totalorder %s74, %s88
      %p90 = scmp.eq.s32.totalorder %s22, 0
      %p91 = por %p89, %p90
      %s93 = sadd.s32 %s92, 1
      %p96 = scmp.eq.s32.totalorder %s16, 1
      %p97 = scmp.ne.s32.totalorder %s92, %s94
      %p98 = scmp.eq.s32.totalorder %s16, 0
      %p99 = por %p97, %p98
      %p100 = scmp.ne.s32.totalorder %s92, %s94
      %p101 = scmp.eq.s32.totalorder %s21, 1
      %p102 = por %p100, %p101
      %p103 = scmp.ne.s32.totalorder %s94, %s95
      %p104 = scmp.eq.s32.totalorder %s21, 0
      %p105 = por %p103, %p104
      %p106 = scmp.ne.s32.totalorder %s94, %s95
      %p107 = scmp.eq.s32.totalorder %s22, 1
      %p108 = por %p106, %p107
      %p110 = scmp.ne.s32.totalorder %s95, %s109
      %p111 = scmp.eq.s32.totalorder %s22, 0
      %p112 = por %p110, %p111
      %s114 = sadd.s32 %s113, 1
      %p117 = scmp.eq.s32.totalorder %s16, 1
      %p118 = scmp.ne.s32.totalorder %s113, %s115
      %p119 = scmp.eq.s32.totalorder %s16, 0
      %p120 = por %p118, %p119
      %p121 = scmp.ne.s32.totalorder %s113, %s115
      %p122 = scmp.eq.s32.totalorder %s21, 1
      %p123 = por %p121, %p122
      %p124 = scmp.ne.s32.totalorder %s115, %s116
      %p125 = scmp.eq.s32.totalorder %s21, 0
      %p126 = por %p124, %p125
      %p127 = scmp.ne.s32.totalorder %s115, %s116
      %p128 = scmp.eq.s32.totalorder %s22, 1
      %p129 = por %p127, %p128
      %p131 = scmp.ne.s32.totalorder %s116, %s130
      %p132 = scmp.eq.s32.totalorder %s22, 0
      %p133 = por %p131, %p132
      %s135 = sadd.s32 %s134, 1
      %p138 = scmp.eq.s32.totalorder %s16, 1
      %p139 = scmp.ne.s32.totalorder %s134, %s136
      %p140 = scmp.eq.s32.totalorder %s16, 0
      %p141 = por %p139, %p140
      %p142 = scmp.ne.s32.totalorder %s134, %s136
      %p143 = scmp.eq.s32.totalorder %s21, 1
      %p144 = por %p142, %p143
      %p145 = scmp.ne.s32.totalorder %s136, %s137
      %p146 = scmp.eq.s32.totalorder %s21, 0
      %p147 = por %p145, %p146
      %p148 = scmp.ne.s32.totalorder %s136, %s137
      %p149 = scmp.eq.s32.totalorder %s22, 1
      %p150 = por %p148, %p149
      %p152 = scmp.ne.s32.totalorder %s137, %s151
      %p153 = scmp.eq.s32.totalorder %s22, 0
      %p154 = por %p152, %p153
      %s156 = sadd.s32 %s155, 1
      %p159 = scmp.eq.s32.totalorder %s16, 1
      %p160 = scmp.ne.s32.totalorder %s155, %s157
      %p161 = scmp.eq.s32.totalorder %s16, 0
      %p162 = por %p160, %p161
      %p163 = scmp.ne.s32.totalorder %s155, %s157
      %p164 = scmp.eq.s32.totalorder %s21, 1
      %p165 = por %p163, %p164
      %p166 = scmp.ne.s32.totalorder %s157, %s158
      %p167 = scmp.eq.s32.totalorder %s21, 0
      %p168 = por %p166, %p167
      %p169 = scmp.ne.s32.totalorder %s157, %s158
      %p170 = scmp.eq.s32.totalorder %s22, 1
      %p171 = por %p169, %p170
      %p173 = scmp.ne.s32.totalorder %s158, %s172
      %p174 = scmp.eq.s32.totalorder %s22, 0
      %p175 = por %p173, %p174
      %s176 = ssub.s32 %s16, %s23
      %p177 = scmp.eq.s32.totalorder %s176, 0
      %s179 = sadd.s32 %s178, 1
      %s180 = scalar_select %p177, %s178, %s179
      %p183 = pneg %p177
      %p184 = scmp.eq.s32.totalorder %s16, 1
      %p185 = por %p183, %p184
      %p186 = scmp.ne.s32.totalorder %s178, %s181
      %p187 = scmp.eq.s32.totalorder %s16, 0
      %p188 = por %p186, %p187
      %p189 = scmp.ne.s32.totalorder %s178, %s181
      %p190 = scmp.eq.s32.totalorder %s21, 1
      %p191 = por %p189, %p190
      %p192 = scmp.ne.s32.totalorder %s181, %s182
      %p193 = scmp.eq.s32.totalorder %s21, 0
      %p194 = por %p192, %p193
      %p195 = scmp.ne.s32.totalorder %s181, %s182
      %p196 = scmp.eq.s32.totalorder %s22, 1
      %p197 = por %p195, %p196
      %p199 = scmp.ne.s32.totalorder %s182, %s198
      %p200 = scmp.eq.s32.totalorder %s22, 0
      %p201 = por %p199, %p200
      %p202 = scmp.le.s32.totalorder 1, %s16
      %p203 = scmp.lt.s32.totalorder %s16, 3
      %p204 = pnand %p202, %p203
      %p205 = pneg %p204
      // Predicated region
      $region9: #{tpu_custom_call.1} parent=5 // pred_check
        _
      $region10: #{tpu_custom_call.1} parent=5 // pred_check_branch
        %207 = sbr.rel (%p204) target = $region12
      $region11: #{tpu_custom_call.1} parent=5 // pred_region
        %s208 = ssub.s32 %s16, 1
        // Predicated region
        $region13: #{tpu_custom_call.1} parent=11 // pred_check
          %p209 = pneg %p63
        $region14: #{tpu_custom_call.1} parent=11 // pred_check_branch
          %211 = sbr.rel (%p209) target = $region16
        $region15: #{tpu_custom_call.1} parent=11 // pred_region
          _
        $region16: #{tpu_custom_call.1} parent=11 // pred_fallthru
          _
        // Predicated region
        $region17: #{tpu_custom_call.1} parent=11 // pred_check
          %p212 = pneg %p84
        $region18: #{tpu_custom_call.1} parent=11 // pred_check_branch
          %214 = sbr.rel (%p212) target = $region20
        $region19: #{tpu_custom_call.1} parent=11 // pred_region
          _
        $region20: #{tpu_custom_call.1} parent=11 // pred_fallthru
          _
        // Predicated region
        $region21: #{tpu_custom_call.1} parent=11 // pred_check
          %p215 = pneg %p105
        $region22: #{tpu_custom_call.1} parent=11 // pred_check_branch
          %217 = sbr.rel (%p215) target = $region24
        $region23: #{tpu_custom_call.1} parent=11 // pred_region
          _
        $region24: #{tpu_custom_call.1} parent=11 // pred_fallthru
          _
        // Predicated region
        $region25: #{tpu_custom_call.1} parent=11 // pred_check
          %p218 = pneg %p126
        $region26: #{tpu_custom_call.1} parent=11 // pred_check_branch
          %220 = sbr.rel (%p218) target = $region28
        $region27: #{tpu_custom_call.1} parent=11 // pred_region
          _
        $region28: #{tpu_custom_call.1} parent=11 // pred_fallthru
          _
        // Predicated region
        $region29: #{tpu_custom_call.1} parent=11 // pred_check
          %p221 = pneg %p147
        $region30: #{tpu_custom_call.1} parent=11 // pred_check_branch
          %223 = sbr.rel (%p221) target = $region32
        $region31: #{tpu_custom_call.1} parent=11 // pred_region
          _
        $region32: #{tpu_custom_call.1} parent=11 // pred_fallthru
          _
        // Predicated region
        $region33: #{tpu_custom_call.1} parent=11 // pred_check
          %p224 = pneg %p168
        $region34: #{tpu_custom_call.1} parent=11 // pred_check_branch
          %226 = sbr.rel (%p224) target = $region36
        $region35: #{tpu_custom_call.1} parent=11 // pred_region
          _
        $region36: #{tpu_custom_call.1} parent=11 // pred_fallthru
          _
      $region12: #{tpu_custom_call.1} parent=5 // pred_fallthru
        _
      %p227 = scmp.lt.s32.totalorder %s16, 2
      // Predicated region
      $region37: #{tpu_custom_call.1} parent=5 // pred_check
        %p228 = pneg %p227
      $region38: #{tpu_custom_call.1} parent=5 // pred_check_branch
        %230 = sbr.rel (%p228) target = $region40
      $region39: #{tpu_custom_call.1} parent=5 // pred_region
        // Predicated region
        $region41: #{tpu_custom_call.1} parent=39 // pred_check
          %p231 = pneg %p36
        $region42: #{tpu_custom_call.1} parent=39 // pred_check_branch
          %233 = sbr.rel (%p231) target = $region44
        $region43: #{tpu_custom_call.1} parent=39 // pred_region
          %s234 = smul.u32 32, %s16
          %p235 = scmp.lt.s32.totalorder %s234, 63
          %s236 = scalar_select %p235, %s234, 63
          %s237 = smul.addr %s236, 8
          %s238 = scalar_lea.vmem %s0, %s237
          %s239 = smul.u32 32, %s16
        $region44: #{tpu_custom_call.1} parent=39 // pred_fallthru
          _
      $region40: #{tpu_custom_call.1} parent=5 // pred_fallthru
        _
      %p240 = scmp.le.s32.totalorder 1, %s16
      %p241 = scmp.lt.s32.totalorder %s16, 3
      %p242 = pnand %p240, %p241
      %p243 = pneg %p242
      // Predicated region
      $region45: #{tpu_custom_call.1} parent=5 // pred_check
        _
      $region46: #{tpu_custom_call.1} parent=5 // pred_check_branch
        %245 = sbr.rel (%p242) target = $region48
      $region47: #{tpu_custom_call.1} parent=5 // pred_region
        %s246 = ssub.s32 %s16, 1
        %s247 = smul.u32 32, %s21
        %p248 = scmp.lt.s32.totalorder %s247, 63
        %s249 = scalar_select %p248, %s247, 63
        %s250 = smul.addr %s249, 8
        %s251 = scalar_lea.vmem %s0, %s250
        %p252 = pneg %p42
        %p253 = pneg %p39
        %p254 = pneg %p63
        %p255 = pneg %p60
        %p256 = pneg %p84
        %p257 = pneg %p81
        %p258 = pneg %p105
        %p259 = pneg %p102
        %p260 = pneg %p126
        %p261 = pneg %p123
        %p262 = pneg %p147
        %p263 = pneg %p144
        %p264 = pneg %p168
        %p265 = pneg %p165
        %p266 = pneg %p194
        %p267 = pneg %p191
        %s268 = sand.u32 %s181, 1
        %s269 = scalar_lea.sflag [#allocation3], %s268
        %s270 = sand.u32 %s181, 1
        %s271 = smul.addr %s270, 64
        %s272 = scalar_lea.vmem [#allocation2], %s271
        %s273 = smul.u32 32, %s21
        %p274 = scmp.lt.s32.totalorder %s273, 63
        %s275 = scalar_select %p274, %s273, 63
        %s276 = smul.addr %s275, 8
        %s277 = scalar_lea.vmem %s0, %s276
        %s278 = smul.u32 32, %s21
        %s279 = smul.u32 2, %s21
        %v280 = vld [vmem:[%s277] sm:$0xff]
        %v281 = vld [vmem:[%s277 + $0x8] sm:$0xff]
        %v282 = vld [vmem:[%s277 + $0x10] sm:$0xff]
        %v283 = vld [vmem:[%s277 + $0x18] sm:$0xff]
        %v284 = vld [vmem:[%s277 + $0x20] sm:$0xff]
        %v285 = vld [vmem:[%s277 + $0x28] sm:$0xff]
        %v286 = vld [vmem:[%s277 + $0x30] sm:$0xff]
        %v287 = vld [vmem:[%s277 + $0x38] sm:$0xff]
        %v288 = vld [vmem:[%s277 + $0x40] sm:$0xff]
        %v289 = vld [vmem:[%s277 + $0x48] sm:$0xff]
        %v290 = vld [vmem:[%s277 + $0x50] sm:$0xff]
        %v291 = vld [vmem:[%s277 + $0x58] sm:$0xff]
        %v292 = vld [vmem:[%s277 + $0x60] sm:$0xff]
        %v293 = vld [vmem:[%s277 + $0x68] sm:$0xff]
        %v294 = vld [vmem:[%s277 + $0x70] sm:$0xff]
        %v295 = vld [vmem:[%s277 + $0x78] sm:$0xff]
        %v296 = vld [vmem:[%s1] sm:$0xff]
        %v297 = vld [vmem:[%s1 + $0x8] sm:$0xff]
        %v298 = vld [vmem:[%s1 + $0x10] sm:$0xff]
        %v299 = vld [vmem:[%s1 + $0x18] sm:$0xff]
        %v300 = vld [vmem:[%s2] sm:$0xff]
        %v301 = vld [vmem:[%s2 + $0x8] sm:$0xff]
        %v302 = vld [vmem:[%s2 + $0x10] sm:$0xff]
        %v303 = vld [vmem:[%s2 + $0x18] sm:$0xff]
        %305 = vset.pattern.permute.xlu0 0
        %306 = vperm.xlu0 %305, %v300
        %v307 = vpop.permute.xlu0 %306
        %310 = vset.pattern.permute.xlu0 0
        %311 = vperm.xlu0 %310, %v301
        %v312 = vpop.permute.xlu0 %311
        %315 = vset.pattern.permute.xlu0 0
        %316 = vperm.xlu0 %315, %v302
        %v317 = vpop.permute.xlu0 %316
        %320 = vset.pattern.permute.xlu0 0
        %321 = vperm.xlu0 %320, %v303
        %v322 = vpop.permute.xlu0 %321
        %vm324 = vcmask 261120
        %v326 = vsel %vm324, %v296, 0
        %v329 = vsel %vm324, %v297, 0
        %v332 = vsel %vm324, %v298, 0
        %v335 = vsel %vm324, %v299, 0
        %v338 = vsel %vm324, %v280, 0
        %v341 = vsel %vm324, %v281, 0
        %v344 = vsel %vm324, %v282, 0
        %v347 = vsel %vm324, %v283, 0
        %v350 = vsel %vm324, %v284, 0
        %v353 = vsel %vm324, %v285, 0
        %v356 = vsel %vm324, %v286, 0
        %v359 = vsel %vm324, %v287, 0
        %v362 = vsel %vm324, %v288, 0
        %v365 = vsel %vm324, %v289, 0
        %v368 = vsel %vm324, %v290, 0
        %v371 = vsel %vm324, %v291, 0
        %v374 = vsel %vm324, %v292, 0
        %v377 = vsel %vm324, %v293, 0
        %v380 = vsel %vm324, %v294, 0
        %v383 = vsel %vm324, %v295, 0
        %385 = vmatprep.subr.mxu0 0.0
        %386 = vmatpush1.xpose.msra.mxu0 %v338
        %387 = vmatprep.subr.mxu0 0.0
        %388 = vmatpush1.xpose.msra.mxu0 %v341
        %389 = vmatprep.subr.mxu0 0.0
        %390 = vmatpush1.xpose.msra.mxu0 %v344
        %391 = vmatprep.subr.mxu0 0.0
        %392 = vmatpush1.xpose.msra.mxu0 %v347
        %393 = vmatprep.subr.mxu0 0.0
        %394 = vmatpush1.xpose.msra.mxu0 %v350
        %395 = vmatprep.subr.mxu0 0.0
        %396 = vmatpush1.xpose.msra.mxu0 %v353
        %397 = vmatprep.subr.mxu0 0.0
        %398 = vmatpush1.xpose.msra.mxu0 %v356
        %399 = vmatprep.subr.mxu0 0.0
        %400 = vmatpush1.xpose.msra.mxu0 %v359
        %401 = vmatprep.subr.mxu0 0.0
        %402 = vmatpush1.xpose.msra.mxu0 %v362
        %403 = vmatprep.subr.mxu0 0.0
        %404 = vmatpush1.xpose.msra.mxu0 %v365
        %405 = vmatprep.subr.mxu0 0.0
        %406 = vmatpush1.xpose.msra.mxu0 %v368
        %407 = vmatprep.subr.mxu0 0.0
        %408 = vmatpush1.xpose.msra.mxu0 %v371
        %409 = vmatprep.subr.mxu0 0.0
        %410 = vmatpush1.xpose.msra.mxu0 %v374
        %411 = vmatprep.subr.mxu0 0.0
        %412 = vmatpush1.xpose.msra.mxu0 %v377
        %413 = vmatprep.subr.mxu0 0.0
        %414 = vmatpush1.xpose.msra.mxu0 %v380
        %415 = vmatprep.subr.mxu0 0.0
        %416 = vmatpush1.xpose.msra.mxu0 %v383
        %417 = vmatprep.subr.mxu0 0.0
        %418 = vmatpush1.xpose.msra.mxu0 0.0
        %419 = vmatprep.subr.mxu0 0.0
        %420 = vmatpush1.xpose.msra.mxu0 0.0
        %421 = vmatprep.subr.mxu0 0.0
        %422 = vmatpush1.xpose.msra.mxu0 0.0
        %423 = vmatprep.subr.mxu0 0.0
        %424 = vmatpush1.xpose.msra.mxu0 0.0
        %425 = vmatprep.subr.mxu0 0.0
        %426 = vmatpush1.xpose.msra.mxu0 0.0
        %427 = vmatprep.subr.mxu0 0.0
        %428 = vmatpush1.xpose.msra.mxu0 0.0
        %429 = vmatprep.subr.mxu0 0.0
        %430 = vmatpush1.xpose.msra.mxu0 0.0
        %431 = vmatprep.subr.mxu0 0.0
        %432 = vmatpush1.xpose.msra.mxu0 0.0
        %433 = vmatprep.subr.mxu0 0.0
        %434 = vmatpush1.xpose.msra.mxu0 0.0
        %435 = vmatprep.subr.mxu0 0.0
        %436 = vmatpush1.xpose.msra.mxu0 0.0
        %437 = vmatprep.subr.mxu0 0.0
        %438 = vmatpush1.xpose.msra.mxu0 0.0
        %439 = vmatprep.subr.mxu0 0.0
        %440 = vmatpush1.xpose.msra.mxu0 0.0
        %441 = vmatprep.subr.mxu0 0.0
        %442 = vmatpush1.xpose.msra.mxu0 0.0
        %443 = vmatprep.subr.mxu0 0.0
        %444 = vmatpush1.xpose.msra.mxu0 0.0
        %445 = vmatprep.subr.mxu0 0.0
        %446 = vmatpush1.xpose.msra.mxu0 0.0
        %447 = vmatprep.subr.mxu0 0.0
        %448 = vmatpush1.xpose.msra.mxu0 0.0
        %449 = vmatprep.mubr.f32.mxu0 0.0
        %450 = vmatmul.mubr.f32.gmra.mrb[0].mxu0 %v326
        %v451 = vpop.f32.mrb[0].mxu0
        %v452 = vadd.f32 %v307, %v451
        %v453 = vpop.f32.mrb[0].mxu0
        %454 = vmatprep.mubr.f32.mxu0 0.0
        %455 = vmatmul.mubr.f32.gmra.mrb[0].mxu0 %v329
        %v456 = vpop.f32.mrb[0].mxu0
        %v457 = vadd.f32 %v312, %v456
        %v458 = vpop.f32.mrb[0].mxu0
        %459 = vmatprep.mubr.f32.mxu0 0.0
        %460 = vmatmul.mubr.f32.gmra.mrb[0].mxu0 %v332
        %v461 = vpop.f32.mrb[0].mxu0
        %v462 = vadd.f32 %v317, %v461
        %v463 = vpop.f32.mrb[0].mxu0
        %464 = vmatprep.mubr.f32.mxu0 0.0
        %465 = vmatmul.mubr.f32.gmra.mrb[0].mxu0 %v335
        %v466 = vpop.f32.mrb[0].mxu0
        %v467 = vadd.f32 %v322, %v466
        %v468 = vpop.f32.mrb[0].mxu0
        %469 = vdwg.mxu0
        %vm470 = vcmp.gt.f32.partialorder %v452, 0.0
        %vm471 = vcmp.gt.f32.partialorder %v457, 0.0
        %vm472 = vcmp.gt.f32.partialorder %v462, 0.0
        %vm473 = vcmp.gt.f32.partialorder %v467, 0.0
        %v474 = vmul.f32 %v452, 1.442695
        %v475 = vpow.pop %v474
        %v476 = vmul.f32 %v457, 1.442695
        %v477 = vpow.pop %v476
        %v478 = vmul.f32 %v462, 1.442695
        %v479 = vpow.pop %v478
        %v480 = vmul.f32 %v467, 1.442695
        %v481 = vpow.pop %v480
        %v482 = vsub.f32 %v475, 1.0
        %v483 = vsub.f32 %v477, 1.0
        %v484 = vsub.f32 %v479, 1.0
        %v485 = vsub.f32 %v481, 1.0
        %v486 = vsel %vm470, %v452, %v482
        %v487 = vsel %vm471, %v457, %v483
        %v488 = vsel %vm472, %v462, %v484
        %v489 = vsel %vm473, %v467, %v485
        %v490 = vld [vmem:[%s3] sm:$0xff]
        %v491 = vld [vmem:[%s3 + $0x8] sm:$0xff]
        %v492 = vld [vmem:[%s3 + $0x10] sm:$0xff]
        %v493 = vld [vmem:[%s3 + $0x18] sm:$0xff]
        %v494 = vld [vmem:[%s4] sm:$0xff]
        %v495 = vld [vmem:[%s4 + $0x8] sm:$0xff]
        %v496 = vld [vmem:[%s4 + $0x10] sm:$0xff]
        %v497 = vld [vmem:[%s4 + $0x18] sm:$0xff]
        %499 = vset.pattern.permute.xlu0 0
        %500 = vperm.xlu0 %499, %v494
        %v501 = vpop.permute.xlu0 %500
        %504 = vset.pattern.permute.xlu0 0
        %505 = vperm.xlu0 %504, %v495
        %v506 = vpop.permute.xlu0 %505
        %509 = vset.pattern.permute.xlu0 0
        %510 = vperm.xlu0 %509, %v496
        %v511 = vpop.permute.xlu0 %510
        %514 = vset.pattern.permute.xlu0 0
        %515 = vperm.xlu0 %514, %v497
        %v516 = vpop.permute.xlu0 %515
        %v519 = vsel %vm324, %v490, 0
        %v522 = vsel %vm324, %v491, 0
        %v525 = vsel %vm324, %v492, 0
        %v528 = vsel %vm324, %v493, 0
        %530 = vmatprep.subr.mxu0 0.0
        %531 = vmatpush1.msra.mxu0 %v486
        %532 = vmatprep.subr.mxu0 0.0
        %533 = vmatpush1.msra.mxu0 %v487
        %534 = vmatprep.subr.mxu0 0.0
        %535 = vmatpush1.msra.mxu0 %v488
        %536 = vmatprep.subr.mxu0 0.0
        %537 = vmatpush1.msra.mxu0 %v489
        %538 = vmatprep.subr.mxu0 0.0
        %539 = vmatpush1.msra.mxu0 0.0
        %540 = vmatprep.subr.mxu0 0.0
        %541 = vmatpush1.msra.mxu0 0.0
        %542 = vmatprep.subr.mxu0 0.0
        %543 = vmatpush1.msra.mxu0 0.0
        %544 = vmatprep.subr.mxu0 0.0
        %545 = vmatpush1.msra.mxu0 0.0
        %546 = vmatprep.subr.mxu0 0.0
        %547 = vmatpush1.msra.mxu0 0.0
        %548 = vmatprep.subr.mxu0 0.0
        %549 = vmatpush1.msra.mxu0 0.0
        %550 = vmatprep.subr.mxu0 0.0
        %551 = vmatpush1.msra.mxu0 0.0
        %552 = vmatprep.subr.mxu0 0.0
        %553 = vmatpush1.msra.mxu0 0.0
        %554 = vmatprep.subr.mxu0 0.0
        %555 = vmatpush1.msra.mxu0 0.0
        %556 = vmatprep.subr.mxu0 0.0
        %557 = vmatpush1.msra.mxu0 0.0
        %558 = vmatprep.subr.mxu0 0.0
        %559 = vmatpush1.msra.mxu0 0.0
        %560 = vmatprep.subr.mxu0 0.0
        %561 = vmatpush1.msra.mxu0 0.0
        %562 = vmatprep.subr.mxu0 0.0
        %563 = vmatpush1.msra.mxu0 0.0
        %564 = vmatprep.subr.mxu0 0.0
        %565 = vmatpush1.msra.mxu0 0.0
        %566 = vmatprep.subr.mxu0 0.0
        %567 = vmatpush1.msra.mxu0 0.0
        %568 = vmatprep.subr.mxu0 0.0
        %569 = vmatpush1.msra.mxu0 0.0
        %570 = vmatprep.subr.mxu0 0.0
        %571 = vmatpush1.msra.mxu0 0.0
        %572 = vmatprep.subr.mxu0 0.0
        %573 = vmatpush1.msra.mxu0 0.0
        %574 = vmatprep.subr.mxu0 0.0
        %575 = vmatpush1.msra.mxu0 0.0
        %576 = vmatprep.subr.mxu0 0.0
        %577 = vmatpush1.msra.mxu0 0.0
        %578 = vmatprep.subr.mxu0 0.0
        %579 = vmatpush1.msra.mxu0 0.0
        %580 = vmatprep.subr.mxu0 0.0
        %581 = vmatpush1.msra.mxu0 0.0
        %582 = vmatprep.subr.mxu0 0.0
        %583 = vmatpush1.msra.mxu0 0.0
        %584 = vmatprep.subr.mxu0 0.0
        %585 = vmatpush1.msra.mxu0 0.0
        %586 = vmatprep.subr.mxu0 0.0
        %587 = vmatpush1.msra.mxu0 0.0
        %588 = vmatprep.subr.mxu0 0.0
        %589 = vmatpush1.msra.mxu0 0.0
        %590 = vmatprep.subr.mxu0 0.0
        %591 = vmatpush1.msra.mxu0 0.0
        %592 = vmatprep.subr.mxu0 0.0
        %593 = vmatpush1.msra.mxu0 0.0
        %594 = vmatprep.mubr.f32.mxu0 0.0
        %595 = vmatmul.mubr.f32.gmra.mrb[0].mxu0 %v519
        %v596 = vpop.f32.mrb[0].mxu0
        %v597 = vadd.f32 %v501, %v596
        %v598 = vpop.f32.mrb[0].mxu0
        %599 = vmatprep.mubr.f32.mxu0 0.0
        %600 = vmatmul.mubr.f32.gmra.mrb[0].mxu0 %v522
        %v601 = vpop.f32.mrb[0].mxu0
        %v602 = vadd.f32 %v506, %v601
        %v603 = vpop.f32.mrb[0].mxu0
        %604 = vmatprep.mubr.f32.mxu0 0.0
        %605 = vmatmul.mubr.f32.gmra.mrb[0].mxu0 %v525
        %v606 = vpop.f32.mrb[0].mxu0
        %v607 = vadd.f32 %v511, %v606
        %v608 = vpop.f32.mrb[0].mxu0
        %609 = vmatprep.mubr.f32.mxu0 0.0
        %610 = vmatmul.mubr.f32.gmra.mrb[0].mxu0 %v528
        %v611 = vpop.f32.mrb[0].mxu0
        %v612 = vadd.f32 %v516, %v611
        %v613 = vpop.f32.mrb[0].mxu0
        %614 = vdwg.mxu0
        %vm615 = vcmp.gt.f32.partialorder %v597, 0.0
        %vm616 = vcmp.gt.f32.partialorder %v602, 0.0
        %vm617 = vcmp.gt.f32.partialorder %v607, 0.0
        %vm618 = vcmp.gt.f32.partialorder %v612, 0.0
        %v619 = vmul.f32 %v597, 1.442695
        %v620 = vpow.pop %v619
        %v621 = vmul.f32 %v602, 1.442695
        %v622 = vpow.pop %v621
        %v623 = vmul.f32 %v607, 1.442695
        %v624 = vpow.pop %v623
        %v625 = vmul.f32 %v612, 1.442695
        %v626 = vpow.pop %v625
        %v627 = vsub.f32 %v620, 1.0
        %v628 = vsub.f32 %v622, 1.0
        %v629 = vsub.f32 %v624, 1.0
        %v630 = vsub.f32 %v626, 1.0
        %v631 = vsel %vm615, %v597, %v627
        %v632 = vsel %vm616, %v602, %v628
        %v633 = vsel %vm617, %v607, %v629
        %v634 = vsel %vm618, %v612, %v630
        %v635 = vld [vmem:[%s5] sm:$0xff]
        %v636 = vld [vmem:[%s5 + $0x8] sm:$0xff]
        %v637 = vld [vmem:[%s5 + $0x10] sm:$0xff]
        %v638 = vld [vmem:[%s5 + $0x18] sm:$0xff]
        %v639 = vld [vmem:[%s6] sm:$0xff]
        %v640 = vld [vmem:[%s6 + $0x8] sm:$0xff]
        %v641 = vld [vmem:[%s6 + $0x10] sm:$0xff]
        %v642 = vld [vmem:[%s6 + $0x18] sm:$0xff]
        %644 = vset.pattern.permute.xlu0 0
        %645 = vperm.xlu0 %644, %v639
        %v646 = vpop.permute.xlu0 %645
        %649 = vset.pattern.permute.xlu0 0
        %650 = vperm.xlu0 %649, %v640
        %v651 = vpop.permute.xlu0 %650
        %654 = vset.pattern.permute.xlu0 0
        %655 = vperm.xlu0 %654, %v641
        %v656 = vpop.permute.xlu0 %655
        %659 = vset.pattern.permute.xlu0 0
        %660 = vperm.xlu0 %659, %v642
        %v661 = vpop.permute.xlu0 %660
        %v664 = vsel %vm324, %v635, 0
        %v667 = vsel %vm324, %v636, 0
        %v670 = vsel %vm324, %v637, 0
        %v673 = vsel %vm324, %v638, 0
        %675 = vmatprep.subr.mxu0 0.0
        %676 = vmatpush1.msra.mxu0 %v631
        %677 = vmatprep.subr.mxu0 0.0
        %678 = vmatpush1.msra.mxu0 %v632
        %679 = vmatprep.subr.mxu0 0.0
        %680 = vmatpush1.msra.mxu0 %v633
        %681 = vmatprep.subr.mxu0 0.0
        %682 = vmatpush1.msra.mxu0 %v634
        %683 = vmatprep.subr.mxu0 0.0
        %684 = vmatpush1.msra.mxu0 0.0
        %685 = vmatprep.subr.mxu0 0.0
        %686 = vmatpush1.msra.mxu0 0.0
        %687 = vmatprep.subr.mxu0 0.0
        %688 = vmatpush1.msra.mxu0 0.0
        %689 = vmatprep.subr.mxu0 0.0
        %690 = vmatpush1.msra.mxu0 0.0
        %691 = vmatprep.subr.mxu0 0.0
        %692 = vmatpush1.msra.mxu0 0.0
        %693 = vmatprep.subr.mxu0 0.0
        %694 = vmatpush1.msra.mxu0 0.0
        %695 = vmatprep.subr.mxu0 0.0
        %696 = vmatpush1.msra.mxu0 0.0
        %697 = vmatprep.subr.mxu0 0.0
        %698 = vmatpush1.msra.mxu0 0.0
        %699 = vmatprep.subr.mxu0 0.0
        %700 = vmatpush1.msra.mxu0 0.0
        %701 = vmatprep.subr.mxu0 0.0
        %702 = vmatpush1.msra.mxu0 0.0
        %703 = vmatprep.subr.mxu0 0.0
        %704 = vmatpush1.msra.mxu0 0.0
        %705 = vmatprep.subr.mxu0 0.0
        %706 = vmatpush1.msra.mxu0 0.0
        %707 = vmatprep.subr.mxu0 0.0
        %708 = vmatpush1.msra.mxu0 0.0
        %709 = vmatprep.subr.mxu0 0.0
        %710 = vmatpush1.msra.mxu0 0.0
        %711 = vmatprep.subr.mxu0 0.0
        %712 = vmatpush1.msra.mxu0 0.0
        %713 = vmatprep.subr.mxu0 0.0
        %714 = vmatpush1.msra.mxu0 0.0
        %715 = vmatprep.subr.mxu0 0.0
        %716 = vmatpush1.msra.mxu0 0.0
        %717 = vmatprep.subr.mxu0 0.0
        %718 = vmatpush1.msra.mxu0 0.0
        %719 = vmatprep.subr.mxu0 0.0
        %720 = vmatpush1.msra.mxu0 0.0
        %721 = vmatprep.subr.mxu0 0.0
        %722 = vmatpush1.msra.mxu0 0.0
        %723 = vmatprep.subr.mxu0 0.0
        %724 = vmatpush1.msra.mxu0 0.0
        %725 = vmatprep.subr.mxu0 0.0
        %726 = vmatpush1.msra.mxu0 0.0
        %727 = vmatprep.subr.mxu0 0.0
        %728 = vmatpush1.msra.mxu0 0.0
        %729 = vmatprep.subr.mxu0 0.0
        %730 = vmatpush1.msra.mxu0 0.0
        %731 = vmatprep.subr.mxu0 0.0
        %732 = vmatpush1.msra.mxu0 0.0
        %733 = vmatprep.subr.mxu0 0.0
        %734 = vmatpush1.msra.mxu0 0.0
        %735 = vmatprep.subr.mxu0 0.0
        %736 = vmatpush1.msra.mxu0 0.0
        %737 = vmatprep.subr.mxu0 0.0
        %738 = vmatpush1.msra.mxu0 0.0
        %739 = vmatprep.mubr.f32.mxu0 0.0
        %740 = vmatmul.mubr.f32.gmra.mrb[0].mxu0 %v664
        %v741 = vpop.f32.mrb[0].mxu0
        %v742 = vadd.f32 %v646, %v741
        %v743 = vpop.f32.mrb[0].mxu0
        %744 = vmatprep.mubr.f32.mxu0 0.0
        %745 = vmatmul.mubr.f32.gmra.mrb[0].mxu0 %v667
        %v746 = vpop.f32.mrb[0].mxu0
        %v747 = vadd.f32 %v651, %v746
        %v748 = vpop.f32.mrb[0].mxu0
        %749 = vmatprep.mubr.f32.mxu0 0.0
        %750 = vmatmul.mubr.f32.gmra.mrb[0].mxu0 %v670
        %v751 = vpop.f32.mrb[0].mxu0
        %v752 = vadd.f32 %v656, %v751
        %v753 = vpop.f32.mrb[0].mxu0
        %754 = vmatprep.mubr.f32.mxu0 0.0
        %755 = vmatmul.mubr.f32.gmra.mrb[0].mxu0 %v673
        %v756 = vpop.f32.mrb[0].mxu0
        %v757 = vadd.f32 %v661, %v756
        %v758 = vpop.f32.mrb[0].mxu0
        %759 = vdwg.mxu0
        %v760 = vmax.f32 %v742, 0.0
        %v761 = vmax.f32 %v747, 0.0
        %v762 = vmax.f32 %v752, 0.0
        %v763 = vmax.f32 %v757, 0.0
        %v764 = vand.u32 2147483647, %v742
        %v765 = vand.u32 2147483647, %v747
        %v766 = vand.u32 2147483647, %v752
        %v767 = vand.u32 2147483647, %v757
        %v768 = vsub.f32 0.0, %v764
        %v769 = vsub.f32 0.0, %v765
        %v770 = vsub.f32 0.0, %v766
        %v771 = vsub.f32 0.0, %v767
        %v772 = vmul.f32 %v768, 1.442695
        %v773 = vpow.pop %v772
        %v774 = vmul.f32 %v769, 1.442695
        %v775 = vpow.pop %v774
        %v776 = vmul.f32 %v770, 1.442695
        %v777 = vpow.pop %v776
        %v778 = vmul.f32 %v771, 1.442695
        %v779 = vpow.pop %v778
        %v780 = vadd.f32 %v773, 1.0
        %v781 = vlog2.pop %v780
        %v782 = vmul.f32 %v781, 0.6931472
        %v783 = vmul.f32 -0.5, %v773
        %v784 = vadd.f32 %v783, 1.0
        %v785 = vmul.f32 %v784, %v773
        %v786 = vand.u32 2147483647, %v773
        %vm787 = vcmp.lt.f32.partialorder %v786, 0.0004427343
        %v788 = vsel %vm787, %v785, %v782
        %v789 = vadd.f32 %v775, 1.0
        %v790 = vlog2.pop %v789
        %v791 = vmul.f32 %v790, 0.6931472
        %v792 = vmul.f32 -0.5, %v775
        %v793 = vadd.f32 %v792, 1.0
        %v794 = vmul.f32 %v793, %v775
        %v795 = vand.u32 2147483647, %v775
        %vm796 = vcmp.lt.f32.partialorder %v795, 0.0004427343
        %v797 = vsel %vm796, %v794, %v791
        %v798 = vadd.f32 %v777, 1.0
        %v799 = vlog2.pop %v798
        %v800 = vmul.f32 %v799, 0.6931472
        %v801 = vmul.f32 -0.5, %v777
        %v802 = vadd.f32 %v801, 1.0
        %v803 = vmul.f32 %v802, %v777
        %v804 = vand.u32 2147483647, %v777
        %vm805 = vcmp.lt.f32.partialorder %v804, 0.0004427343
        %v806 = vsel %vm805, %v803, %v800
        %v807 = vadd.f32 %v779, 1.0
        %v808 = vlog2.pop %v807
        %v809 = vmul.f32 %v808, 0.6931472
        %v810 = vmul.f32 -0.5, %v779
        %v811 = vadd.f32 %v810, 1.0
        %v812 = vmul.f32 %v811, %v779
        %v813 = vand.u32 2147483647, %v779
        %vm814 = vcmp.lt.f32.partialorder %v813, 0.0004427343
        %v815 = vsel %vm814, %v812, %v809
        %v816 = vadd.f32 %v760, %v788
        %v817 = vadd.f32 %v761, %v797
        %v818 = vadd.f32 %v762, %v806
        %v819 = vadd.f32 %v763, %v815
        %v820 = vmax.f32 %v816, 0.0001
        %v821 = vmax.f32 %v817, 0.0001
        %v822 = vmax.f32 %v818, 0.0001
        %v823 = vmax.f32 %v819, 0.0001
        %v824 = vmin.f32 %v820, 10.0
        %v825 = vmin.f32 %v821, 10.0
        %v826 = vmin.f32 %v822, 10.0
        %v827 = vmin.f32 %v823, 10.0
        %828 = vst [vmem:[%s272] sm:$0xff] %v824
        %829 = vst [vmem:[%s272 + $0x10] sm:$0xff] %v825
        %830 = vst [vmem:[%s272 + $0x20] sm:$0xff] %v826
        %831 = vst [vmem:[%s272 + $0x30] sm:$0xff] %v827
        %v832 = vld [vmem:[%s277 + $0x80] sm:$0xff]
        %v833 = vld [vmem:[%s277 + $0x88] sm:$0xff]
        %v834 = vld [vmem:[%s277 + $0x90] sm:$0xff]
        %v835 = vld [vmem:[%s277 + $0x98] sm:$0xff]
        %v836 = vld [vmem:[%s277 + $0xa0] sm:$0xff]
        %v837 = vld [vmem:[%s277 + $0xa8] sm:$0xff]
        %v838 = vld [vmem:[%s277 + $0xb0] sm:$0xff]
        %v839 = vld [vmem:[%s277 + $0xb8] sm:$0xff]
        %v840 = vld [vmem:[%s277 + $0xc0] sm:$0xff]
        %v841 = vld [vmem:[%s277 + $0xc8] sm:$0xff]
        %v842 = vld [vmem:[%s277 + $0xd0] sm:$0xff]
        %v843 = vld [vmem:[%s277 + $0xd8] sm:$0xff]
        %v844 = vld [vmem:[%s277 + $0xe0] sm:$0xff]
        %v845 = vld [vmem:[%s277 + $0xe8] sm:$0xff]
        %v846 = vld [vmem:[%s277 + $0xf0] sm:$0xff]
        %v847 = vld [vmem:[%s277 + $0xf8] sm:$0xff]
        %v848 = vld [vmem:[%s1] sm:$0xff]
        %v849 = vld [vmem:[%s1 + $0x8] sm:$0xff]
        %v850 = vld [vmem:[%s1 + $0x10] sm:$0xff]
        %v851 = vld [vmem:[%s1 + $0x18] sm:$0xff]
        %v852 = vld [vmem:[%s2] sm:$0xff]
        %v853 = vld [vmem:[%s2 + $0x8] sm:$0xff]
        %v854 = vld [vmem:[%s2 + $0x10] sm:$0xff]
        %v855 = vld [vmem:[%s2 + $0x18] sm:$0xff]
        %857 = vset.pattern.permute.xlu0 0
        %858 = vperm.xlu0 %857, %v852
        %v859 = vpop.permute.xlu0 %858
        %862 = vset.pattern.permute.xlu0 0
        %863 = vperm.xlu0 %862, %v853
        %v864 = vpop.permute.xlu0 %863
        %867 = vset.pattern.permute.xlu0 0
        %868 = vperm.xlu0 %867, %v854
        %v869 = vpop.permute.xlu0 %868
        %872 = vset.pattern.permute.xlu0 0
        %873 = vperm.xlu0 %872, %v855
        %v874 = vpop.permute.xlu0 %873
        %v877 = vsel %vm324, %v848, 0
        %v880 = vsel %vm324, %v849, 0
        %v883 = vsel %vm324, %v850, 0
        %v886 = vsel %vm324, %v851, 0
        %v889 = vsel %vm324, %v832, 0
        %v892 = vsel %vm324, %v833, 0
        %v895 = vsel %vm324, %v834, 0
        %v898 = vsel %vm324, %v835, 0
        %v901 = vsel %vm324, %v836, 0
        %v904 = vsel %vm324, %v837, 0
        %v907 = vsel %vm324, %v838, 0
        %v910 = vsel %vm324, %v839, 0
        %v913 = vsel %vm324, %v840, 0
        %v916 = vsel %vm324, %v841, 0
        %v919 = vsel %vm324, %v842, 0
        %v922 = vsel %vm324, %v843, 0
        %v925 = vsel %vm324, %v844, 0
        %v928 = vsel %vm324, %v845, 0
        %v931 = vsel %vm324, %v846, 0
        %v934 = vsel %vm324, %v847, 0
        %936 = vmatprep.subr.mxu0 0.0
        %937 = vmatpush1.xpose.msra.mxu0 %v889
        %938 = vmatprep.subr.mxu0 0.0
        %939 = vmatpush1.xpose.msra.mxu0 %v892
        %940 = vmatprep.subr.mxu0 0.0
        %941 = vmatpush1.xpose.msra.mxu0 %v895
        %942 = vmatprep.subr.mxu0 0.0
        %943 = vmatpush1.xpose.msra.mxu0 %v898
        %944 = vmatprep.subr.mxu0 0.0
        %945 = vmatpush1.xpose.msra.mxu0 %v901
        %946 = vmatprep.subr.mxu0 0.0
        %947 = vmatpush1.xpose.msra.mxu0 %v904
        %948 = vmatprep.subr.mxu0 0.0
        %949 = vmatpush1.xpose.msra.mxu0 %v907
        %950 = vmatprep.subr.mxu0 0.0
        %951 = vmatpush1.xpose.msra.mxu0 %v910
        %952 = vmatprep.subr.mxu0 0.0
        %953 = vmatpush1.xpose.msra.mxu0 %v913
        %954 = vmatprep.subr.mxu0 0.0
        %955 = vmatpush1.xpose.msra.mxu0 %v916
        %956 = vmatprep.subr.mxu0 0.0
        %957 = vmatpush1.xpose.msra.mxu0 %v919
        %958 = vmatprep.subr.mxu0 0.0
        %959 = vmatpush1.xpose.msra.mxu0 %v922
        %960 = vmatprep.subr.mxu0 0.0
        %961 = vmatpush1.xpose.msra.mxu0 %v925
        %962 = vmatprep.subr.mxu0 0.0
        %963 = vmatpush1.xpose.msra.mxu0 %v928
        %964 = vmatprep.subr.mxu0 0.0
        %965 = vmatpush1.xpose.msra.mxu0 %v931
        %966 = vmatprep.subr.mxu0 0.0
        %967 = vmatpush1.xpose.msra.mxu0 %v934
        %968 = vmatprep.subr.mxu0 0.0
        %969 = vmatpush1.xpose.msra.mxu0 0.0
        %970 = vmatprep.subr.mxu0 0.0
        %971 = vmatpush1.xpose.msra.mxu0 0.0
        %972 = vmatprep.subr.mxu0 0.0
        %973 = vmatpush1.xpose.msra.mxu0 0.0
        %974 = vmatprep.subr.mxu0 0.0
        %975 = vmatpush1.xpose.msra.mxu0 0.0
        %976 = vmatprep.subr.mxu0 0.0
        %977 = vmatpush1.xpose.msra.mxu0 0.0
        %978 = vmatprep.subr.mxu0 0.0
        %979 = vmatpush1.xpose.msra.mxu0 0.0
        %980 = vmatprep.subr.mxu0 0.0
        %981 = vmatpush1.xpose.msra.mxu0 0.0
        %982 = vmatprep.subr.mxu0 0.0
        %983 = vmatpush1.xpose.msra.mxu0 0.0
        %984 = vmatprep.subr.mxu0 0.0
        %985 = vmatpush1.xpose.msra.mxu0 0.0
        %986 = vmatprep.subr.mxu0 0.0
        %987 = vmatpush1.xpose.msra.mxu0 0.0
        %988 = vmatprep.subr.mxu0 0.0
        %989 = vmatpush1.xpose.msra.mxu0 0.0
        %990 = vmatprep.subr.mxu0 0.0
        %991 = vmatpush1.xpose.msra.mxu0 0.0
        %992 = vmatprep.subr.mxu0 0.0
        %993 = vmatpush1.xpose.msra.mxu0 0.0
        %994 = vmatprep.subr.mxu0 0.0
        %995 = vmatpush1.xpose.msra.mxu0 0.0
        %996 = vmatprep.subr.mxu0 0.0
        %997 = vmatpush1.xpose.msra.mxu0 0.0
        %998 = vmatprep.subr.mxu0 0.0
        %999 = vmatpush1.xpose.msra.mxu0 0.0
        %1000 = vmatprep.mubr.f32.mxu0 0.0
        %1001 = vmatmul.mubr.f32.gmra.mrb[0].mxu0 %v877
        %v1002 = vpop.f32.mrb[0].mxu0
        %v1003 = vadd.f32 %v859, %v1002
        %v1004 = vpop.f32.mrb[0].mxu0
        %1005 = vmatprep.mubr.f32.mxu0 0.0
        %1006 = vmatmul.mubr.f32.gmra.mrb[0].mxu0 %v880
        %v1007 = vpop.f32.mrb[0].mxu0
        %v1008 = vadd.f32 %v864, %v1007
        %v1009 = vpop.f32.mrb[0].mxu0
        %1010 = vmatprep.mubr.f32.mxu0 0.0
        %1011 = vmatmul.mubr.f32.gmra.mrb[0].mxu0 %v883
        %v1012 = vpop.f32.mrb[0].mxu0
        %v1013 = vadd.f32 %v869, %v1012
        %v1014 = vpop.f32.mrb[0].mxu0
        %1015 = vmatprep.mubr.f32.mxu0 0.0
        %1016 = vmatmul.mubr.f32.gmra.mrb[0].mxu0 %v886
        %v1017 = vpop.f32.mrb[0].mxu0
        %v1018 = vadd.f32 %v874, %v1017
        %v1019 = vpop.f32.mrb[0].mxu0
        %1020 = vdwg.mxu0
        %vm1021 = vcmp.gt.f32.partialorder %v1003, 0.0
        %vm1022 = vcmp.gt.f32.partialorder %v1008, 0.0
        %vm1023 = vcmp.gt.f32.partialorder %v1013, 0.0
        %vm1024 = vcmp.gt.f32.partialorder %v1018, 0.0
        %v1025 = vmul.f32 %v1003, 1.442695
        %v1026 = vpow.pop %v1025
        %v1027 = vmul.f32 %v1008, 1.442695
        %v1028 = vpow.pop %v1027
        %v1029 = vmul.f32 %v1013, 1.442695
        %v1030 = vpow.pop %v1029
        %v1031 = vmul.f32 %v1018, 1.442695
        %v1032 = vpow.pop %v1031
        %v1033 = vsub.f32 %v1026, 1.0
        %v1034 = vsub.f32 %v1028, 1.0
        %v1035 = vsub.f32 %v1030, 1.0
        %v1036 = vsub.f32 %v1032, 1.0
        %v1037 = vsel %vm1021, %v1003, %v1033
        %v1038 = vsel %vm1022, %v1008, %v1034
        %v1039 = vsel %vm1023, %v1013, %v1035
        %v1040 = vsel %vm1024, %v1018, %v1036
        %v1041 = vld [vmem:[%s3] sm:$0xff]
        %v1042 = vld [vmem:[%s3 + $0x8] sm:$0xff]
        %v1043 = vld [vmem:[%s3 + $0x10] sm:$0xff]
        %v1044 = vld [vmem:[%s3 + $0x18] sm:$0xff]
        %v1045 = vld [vmem:[%s4] sm:$0xff]
        %v1046 = vld [vmem:[%s4 + $0x8] sm:$0xff]
        %v1047 = vld [vmem:[%s4 + $0x10] sm:$0xff]
        %v1048 = vld [vmem:[%s4 + $0x18] sm:$0xff]
        %1050 = vset.pattern.permute.xlu0 0
        %1051 = vperm.xlu0 %1050, %v1045
        %v1052 = vpop.permute.xlu0 %1051
        %1055 = vset.pattern.permute.xlu0 0
        %1056 = vperm.xlu0 %1055, %v1046
        %v1057 = vpop.permute.xlu0 %1056
        %1060 = vset.pattern.permute.xlu0 0
        %1061 = vperm.xlu0 %1060, %v1047
        %v1062 = vpop.permute.xlu0 %1061
        %1065 = vset.pattern.permute.xlu0 0
        %1066 = vperm.xlu0 %1065, %v1048
        %v1067 = vpop.permute.xlu0 %1066
        %v1070 = vsel %vm324, %v1041, 0
        %v1073 = vsel %vm324, %v1042, 0
        %v1076 = vsel %vm324, %v1043, 0
        %v1079 = vsel %vm324, %v1044, 0
        %1081 = vmatprep.subr.mxu0 0.0
        %1082 = vmatpush1.msra.mxu0 %v1037
        %1083 = vmatprep.subr.mxu0 0.0
        %1084 = vmatpush1.msra.mxu0 %v1038
        %1085 = vmatprep.subr.mxu0 0.0
        %1086 = vmatpush1.msra.mxu0 %v1039
        %1087 = vmatprep.subr.mxu0 0.0
        %1088 = vmatpush1.msra.mxu0 %v1040
        %1089 = vmatprep.subr.mxu0 0.0
        %1090 = vmatpush1.msra.mxu0 0.0
        %1091 = vmatprep.subr.mxu0 0.0
        %1092 = vmatpush1.msra.mxu0 0.0
        %1093 = vmatprep.subr.mxu0 0.0
        %1094 = vmatpush1.msra.mxu0 0.0
        %1095 = vmatprep.subr.mxu0 0.0
        %1096 = vmatpush1.msra.mxu0 0.0
        %1097 = vmatprep.subr.mxu0 0.0
        %1098 = vmatpush1.msra.mxu0 0.0
        %1099 = vmatprep.subr.mxu0 0.0
        %1100 = vmatpush1.msra.mxu0 0.0
        %1101 = vmatprep.subr.mxu0 0.0
        %1102 = vmatpush1.msra.mxu0 0.0
        %1103 = vmatprep.subr.mxu0 0.0
        %1104 = vmatpush1.msra.mxu0 0.0
        %1105 = vmatprep.subr.mxu0 0.0
        %1106 = vmatpush1.msra.mxu0 0.0
        %1107 = vmatprep.subr.mxu0 0.0
        %1108 = vmatpush1.msra.mxu0 0.0
        %1109 = vmatprep.subr.mxu0 0.0
        %1110 = vmatpush1.msra.mxu0 0.0
        %1111 = vmatprep.subr.mxu0 0.0
        %1112 = vmatpush1.msra.mxu0 0.0
        %1113 = vmatprep.subr.mxu0 0.0
        %1114 = vmatpush1.msra.mxu0 0.0
        %1115 = vmatprep.subr.mxu0 0.0
        %1116 = vmatpush1.msra.mxu0 0.0
        %1117 = vmatprep.subr.mxu0 0.0
        %1118 = vmatpush1.msra.mxu0 0.0
        %1119 = vmatprep.subr.mxu0 0.0
        %1120 = vmatpush1.msra.mxu0 0.0
        %1121 = vmatprep.subr.mxu0 0.0
        %1122 = vmatpush1.msra.mxu0 0.0
        %1123 = vmatprep.subr.mxu0 0.0
        %1124 = vmatpush1.msra.mxu0 0.0
        %1125 = vmatprep.subr.mxu0 0.0
        %1126 = vmatpush1.msra.mxu0 0.0
        %1127 = vmatprep.subr.mxu0 0.0
        %1128 = vmatpush1.msra.mxu0 0.0
        %1129 = vmatprep.subr.mxu0 0.0
        %1130 = vmatpush1.msra.mxu0 0.0
        %1131 = vmatprep.subr.mxu0 0.0
        %1132 = vmatpush1.msra.mxu0 0.0
        %1133 = vmatprep.subr.mxu0 0.0
        %1134 = vmatpush1.msra.mxu0 0.0
        %1135 = vmatprep.subr.mxu0 0.0
        %1136 = vmatpush1.msra.mxu0 0.0
        %1137 = vmatprep.subr.mxu0 0.0
        %1138 = vmatpush1.msra.mxu0 0.0
        %1139 = vmatprep.subr.mxu0 0.0
        %1140 = vmatpush1.msra.mxu0 0.0
        %1141 = vmatprep.subr.mxu0 0.0
        %1142 = vmatpush1.msra.mxu0 0.0
        %1143 = vmatprep.subr.mxu0 0.0
        %1144 = vmatpush1.msra.mxu0 0.0
        %1145 = vmatprep.mubr.f32.mxu0 0.0
        %1146 = vmatmul.mubr.f32.gmra.mrb[0].mxu0 %v1070
        %v1147 = vpop.f32.mrb[0].mxu0
        %v1148 = vadd.f32 %v1052, %v1147
        %v1149 = vpop.f32.mrb[0].mxu0
        %1150 = vmatprep.mubr.f32.mxu0 0.0
        %1151 = vmatmul.mubr.f32.gmra.mrb[0].mxu0 %v1073
        %v1152 = vpop.f32.mrb[0].mxu0
        %v1153 = vadd.f32 %v1057, %v1152
        %v1154 = vpop.f32.mrb[0].mxu0
        %1155 = vmatprep.mubr.f32.mxu0 0.0
        %1156 = vmatmul.mubr.f32.gmra.mrb[0].mxu0 %v1076
        %v1157 = vpop.f32.mrb[0].mxu0
        %v1158 = vadd.f32 %v1062, %v1157
        %v1159 = vpop.f32.mrb[0].mxu0
        %1160 = vmatprep.mubr.f32.mxu0 0.0
        %1161 = vmatmul.mubr.f32.gmra.mrb[0].mxu0 %v1079
        %v1162 = vpop.f32.mrb[0].mxu0
        %v1163 = vadd.f32 %v1067, %v1162
        %v1164 = vpop.f32.mrb[0].mxu0
        %1165 = vdwg.mxu0
        %vm1166 = vcmp.gt.f32.partialorder %v1148, 0.0
        %vm1167 = vcmp.gt.f32.partialorder %v1153, 0.0
        %vm1168 = vcmp.gt.f32.partialorder %v1158, 0.0
        %vm1169 = vcmp.gt.f32.partialorder %v1163, 0.0
        %v1170 = vmul.f32 %v1148, 1.442695
        %v1171 = vpow.pop %v1170
        %v1172 = vmul.f32 %v1153, 1.442695
        %v1173 = vpow.pop %v1172
        %v1174 = vmul.f32 %v1158, 1.442695
        %v1175 = vpow.pop %v1174
        %v1176 = vmul.f32 %v1163, 1.442695
        %v1177 = vpow.pop %v1176
        %v1178 = vsub.f32 %v1171, 1.0
        %v1179 = vsub.f32 %v1173, 1.0
        %v1180 = vsub.f32 %v1175, 1.0
        %v1181 = vsub.f32 %v1177, 1.0
        %v1182 = vsel %vm1166, %v1148, %v1178
        %v1183 = vsel %vm1167, %v1153, %v1179
        %v1184 = vsel %vm1168, %v1158, %v1180
        %v1185 = vsel %vm1169, %v1163, %v1181
        %v1186 = vld [vmem:[%s5] sm:$0xff]
        %v1187 = vld [vmem:[%s5 + $0x8] sm:$0xff]
        %v1188 = vld [vmem:[%s5 + $0x10] sm:$0xff]
        %v1189 = vld [vmem:[%s5 + $0x18] sm:$0xff]
        %v1190 = vld [vmem:[%s6] sm:$0xff]
        %v1191 = vld [vmem:[%s6 + $0x8] sm:$0xff]
        %v1192 = vld [vmem:[%s6 + $0x10] sm:$0xff]
        %v1193 = vld [vmem:[%s6 + $0x18] sm:$0xff]
        %1195 = vset.pattern.permute.xlu0 0
        %1196 = vperm.xlu0 %1195, %v1190
        %v1197 = vpop.permute.xlu0 %1196
        %1200 = vset.pattern.permute.xlu0 0
        %1201 = vperm.xlu0 %1200, %v1191
        %v1202 = vpop.permute.xlu0 %1201
        %1205 = vset.pattern.permute.xlu0 0
        %1206 = vperm.xlu0 %1205, %v1192
        %v1207 = vpop.permute.xlu0 %1206
        %1210 = vset.pattern.permute.xlu0 0
        %1211 = vperm.xlu0 %1210, %v1193
        %v1212 = vpop.permute.xlu0 %1211
        %v1215 = vsel %vm324, %v1186, 0
        %v1218 = vsel %vm324, %v1187, 0
        %v1221 = vsel %vm324, %v1188, 0
        %v1224 = vsel %vm324, %v1189, 0
        %1226 = vmatprep.subr.mxu0 0.0
        %1227 = vmatpush1.msra.mxu0 %v1182
        %1228 = vmatprep.subr.mxu0 0.0
        %1229 = vmatpush1.msra.mxu0 %v1183
        %1230 = vmatprep.subr.mxu0 0.0
        %1231 = vmatpush1.msra.mxu0 %v1184
        %1232 = vmatprep.subr.mxu0 0.0
        %1233 = vmatpush1.msra.mxu0 %v1185
        %1234 = vmatprep.subr.mxu0 0.0
        %1235 = vmatpush1.msra.mxu0 0.0
        %1236 = vmatprep.subr.mxu0 0.0
        %1237 = vmatpush1.msra.mxu0 0.0
        %1238 = vmatprep.subr.mxu0 0.0
        %1239 = vmatpush1.msra.mxu0 0.0
        %1240 = vmatprep.subr.mxu0 0.0
        %1241 = vmatpush1.msra.mxu0 0.0
        %1242 = vmatprep.subr.mxu0 0.0
        %1243 = vmatpush1.msra.mxu0 0.0
        %1244 = vmatprep.subr.mxu0 0.0
        %1245 = vmatpush1.msra.mxu0 0.0
        %1246 = vmatprep.subr.mxu0 0.0
        %1247 = vmatpush1.msra.mxu0 0.0
        %1248 = vmatprep.subr.mxu0 0.0
        %1249 = vmatpush1.msra.mxu0 0.0
        %1250 = vmatprep.subr.mxu0 0.0
        %1251 = vmatpush1.msra.mxu0 0.0
        %1252 = vmatprep.subr.mxu0 0.0
        %1253 = vmatpush1.msra.mxu0 0.0
        %1254 = vmatprep.subr.mxu0 0.0
        %1255 = vmatpush1.msra.mxu0 0.0
        %1256 = vmatprep.subr.mxu0 0.0
        %1257 = vmatpush1.msra.mxu0 0.0
        %1258 = vmatprep.subr.mxu0 0.0
        %1259 = vmatpush1.msra.mxu0 0.0
        %1260 = vmatprep.subr.mxu0 0.0
        %1261 = vmatpush1.msra.mxu0 0.0
        %1262 = vmatprep.subr.mxu0 0.0
        %1263 = vmatpush1.msra.mxu0 0.0
        %1264 = vmatprep.subr.mxu0 0.0
        %1265 = vmatpush1.msra.mxu0 0.0
        %1266 = vmatprep.subr.mxu0 0.0
        %1267 = vmatpush1.msra.mxu0 0.0
        %1268 = vmatprep.subr.mxu0 0.0
        %1269 = vmatpush1.msra.mxu0 0.0
        %1270 = vmatprep.subr.mxu0 0.0
        %1271 = vmatpush1.msra.mxu0 0.0
        %1272 = vmatprep.subr.mxu0 0.0
        %1273 = vmatpush1.msra.mxu0 0.0
        %1274 = vmatprep.subr.mxu0 0.0
        %1275 = vmatpush1.msra.mxu0 0.0
        %1276 = vmatprep.subr.mxu0 0.0
        %1277 = vmatpush1.msra.mxu0 0.0
        %1278 = vmatprep.subr.mxu0 0.0
        %1279 = vmatpush1.msra.mxu0 0.0
        %1280 = vmatprep.subr.mxu0 0.0
        %1281 = vmatpush1.msra.mxu0 0.0
        %1282 = vmatprep.subr.mxu0 0.0
        %1283 = vmatpush1.msra.mxu0 0.0
        %1284 = vmatprep.subr.mxu0 0.0
        %1285 = vmatpush1.msra.mxu0 0.0
        %1286 = vmatprep.subr.mxu0 0.0
        %1287 = vmatpush1.msra.mxu0 0.0
        %1288 = vmatprep.subr.mxu0 0.0
        %1289 = vmatpush1.msra.mxu0 0.0
        %1290 = vmatprep.mubr.f32.mxu0 0.0
        %1291 = vmatmul.mubr.f32.gmra.mrb[0].mxu0 %v1215
        %v1292 = vpop.f32.mrb[0].mxu0
        %v1293 = vadd.f32 %v1197, %v1292
        %v1294 = vpop.f32.mrb[0].mxu0
        %1295 = vmatprep.mubr.f32.mxu0 0.0
        %1296 = vmatmul.mubr.f32.gmra.mrb[0].mxu0 %v1218
        %v1297 = vpop.f32.mrb[0].mxu0
        %v1298 = vadd.f32 %v1202, %v1297
        %v1299 = vpop.f32.mrb[0].mxu0
        %1300 = vmatprep.mubr.f32.mxu0 0.0
        %1301 = vmatmul.mubr.f32.gmra.mrb[0].mxu0 %v1221
        %v1302 = vpop.f32.mrb[0].mxu0
        %v1303 = vadd.f32 %v1207, %v1302
        %v1304 = vpop.f32.mrb[0].mxu0
        %1305 = vmatprep.mubr.f32.mxu0 0.0
        %1306 = vmatmul.mubr.f32.gmra.mrb[0].mxu0 %v1224
        %v1307 = vpop.f32.mrb[0].mxu0
        %v1308 = vadd.f32 %v1212, %v1307
        %v1309 = vpop.f32.mrb[0].mxu0
        %1310 = vdwg.mxu0
        %v1311 = vmax.f32 %v1293, 0.0
        %v1312 = vmax.f32 %v1298, 0.0
        %v1313 = vmax.f32 %v1303, 0.0
        %v1314 = vmax.f32 %v1308, 0.0
        %v1315 = vand.u32 2147483647, %v1293
        %v1316 = vand.u32 2147483647, %v1298
        %v1317 = vand.u32 2147483647, %v1303
        %v1318 = vand.u32 2147483647, %v1308
        %v1319 = vsub.f32 0.0, %v1315
        %v1320 = vsub.f32 0.0, %v1316
        %v1321 = vsub.f32 0.0, %v1317
        %v1322 = vsub.f32 0.0, %v1318
        %v1323 = vmul.f32 %v1319, 1.442695
        %v1324 = vpow.pop %v1323
        %v1325 = vmul.f32 %v1320, 1.442695
        %v1326 = vpow.pop %v1325
        %v1327 = vmul.f32 %v1321, 1.442695
        %v1328 = vpow.pop %v1327
        %v1329 = vmul.f32 %v1322, 1.442695
        %v1330 = vpow.pop %v1329
        %v1331 = vadd.f32 %v1324, 1.0
        %v1332 = vlog2.pop %v1331
        %v1333 = vmul.f32 %v1332, 0.6931472
        %v1334 = vmul.f32 -0.5, %v1324
        %v1335 = vadd.f32 %v1334, 1.0
        %v1336 = vmul.f32 %v1335, %v1324
        %v1337 = vand.u32 2147483647, %v1324
        %vm1338 = vcmp.lt.f32.partialorder %v1337, 0.0004427343
        %v1339 = vsel %vm1338, %v1336, %v1333
        %v1340 = vadd.f32 %v1326, 1.0
        %v1341 = vlog2.pop %v1340
        %v1342 = vmul.f32 %v1341, 0.6931472
        %v1343 = vmul.f32 -0.5, %v1326
        %v1344 = vadd.f32 %v1343, 1.0
        %v1345 = vmul.f32 %v1344, %v1326
        %v1346 = vand.u32 2147483647, %v1326
        %vm1347 = vcmp.lt.f32.partialorder %v1346, 0.0004427343
        %v1348 = vsel %vm1347, %v1345, %v1342
        %v1349 = vadd.f32 %v1328, 1.0
        %v1350 = vlog2.pop %v1349
        %v1351 = vmul.f32 %v1350, 0.6931472
        %v1352 = vmul.f32 -0.5, %v1328
        %v1353 = vadd.f32 %v1352, 1.0
        %v1354 = vmul.f32 %v1353, %v1328
        %v1355 = vand.u32 2147483647, %v1328
        %vm1356 = vcmp.lt.f32.partialorder %v1355, 0.0004427343
        %v1357 = vsel %vm1356, %v1354, %v1351
        %v1358 = vadd.f32 %v1330, 1.0
        %v1359 = vlog2.pop %v1358
        %v1360 = vmul.f32 %v1359, 0.6931472
        %v1361 = vmul.f32 -0.5, %v1330
        %v1362 = vadd.f32 %v1361, 1.0
        %v1363 = vmul.f32 %v1362, %v1330
        %v1364 = vand.u32 2147483647, %v1330
        %vm1365 = vcmp.lt.f32.partialorder %v1364, 0.0004427343
        %v1366 = vsel %vm1365, %v1363, %v1360
        %v1367 = vadd.f32 %v1311, %v1339
        %v1368 = vadd.f32 %v1312, %v1348
        %v1369 = vadd.f32 %v1313, %v1357
        %v1370 = vadd.f32 %v1314, %v1366
        %v1371 = vmax.f32 %v1367, 0.0001
        %v1372 = vmax.f32 %v1368, 0.0001
        %v1373 = vmax.f32 %v1369, 0.0001
        %v1374 = vmax.f32 %v1370, 0.0001
        %v1375 = vmin.f32 %v1371, 10.0
        %v1376 = vmin.f32 %v1372, 10.0
        %v1377 = vmin.f32 %v1373, 10.0
        %v1378 = vmin.f32 %v1374, 10.0
        %1379 = vst [vmem:[%s272 + $0x8] sm:$0xff] %v1375
        %1380 = vst [vmem:[%s272 + $0x18] sm:$0xff] %v1376
        %1381 = vst [vmem:[%s272 + $0x28] sm:$0xff] %v1377
        %1382 = vst [vmem:[%s272 + $0x38] sm:$0xff] %v1378
        %s1383 = sand.u32 %s181, 1
        %s1384 = scalar_lea.sflag [#allocation3], %s1383
        %s1385 = sand.u32 %s181, 1
        %s1386 = smul.addr %s1385, 64
        %s1387 = scalar_lea.vmem [#allocation2], %s1386
        // Predicated region
        $region49: #{tpu_custom_call.1} parent=47 // pred_check
          %p1388 = pneg %p191
        $region50: #{tpu_custom_call.1} parent=47 // pred_check_branch
          %1390 = sbr.rel (%p1388) target = $region52
        $region51: #{tpu_custom_call.1} parent=47 // pred_region
          %s1391 = smul.u32 2, %s21
          %s1393 = ssub.s32 1024, 1024
          %1394 = vsyncadd %s1384, %s1393
          %s1395 = smul.addr %s1391, 128
          %s1396 = scalar_lea.hbm %s7, %s1395
          %s1397 = sshll.u32 %s1387, 4
          %s1398 = int_to_ptr.vmem [resolvable:$true] %s1397
          %1403 = dma.vmem_to_hbm [thread:$0]  %s1398, 1024, %s1396, %s1384, 256, 512, 16
        $region52: #{tpu_custom_call.1} parent=47 // pred_fallthru
          _
      $region48: #{tpu_custom_call.1} parent=5 // pred_fallthru
        _
      %p1404 = scmp.le.s32.totalorder 2, %s16
      // Predicated region
      $region53: #{tpu_custom_call.1} parent=5 // pred_check
        %p1405 = pneg %p1404
      $region54: #{tpu_custom_call.1} parent=5 // pred_check_branch
        %1407 = sbr.rel (%p1405) target = $region56
      $region55: #{tpu_custom_call.1} parent=5 // pred_region
        %s1408 = ssub.s32 %s16, 2
        // Predicated region
        $region57: #{tpu_custom_call.1} parent=55 // pred_check
          %p1409 = pneg %p197
        $region58: #{tpu_custom_call.1} parent=55 // pred_check_branch
          %1411 = sbr.rel (%p1409) target = $region60
        $region59: #{tpu_custom_call.1} parent=55 // pred_region
          %s1412 = sand.u32 %s182, 1
          %s1413 = scalar_lea.sflag [#allocation3], %s1412
          %s1414 = sand.u32 %s182, 1
          %s1415 = smul.addr %s1414, 64
          %s1416 = scalar_lea.vmem [#allocation2], %s1415
          %1417 = dma.done %s1413, 1024
        $region60: #{tpu_custom_call.1} parent=55 // pred_fallthru
          _
      $region56: #{tpu_custom_call.1} parent=5 // pred_fallthru
        _
    $region6: #{tpu_custom_call.1} parent=1 // loop_footer
      %s20 = sadd.s32 1, %s16
    $region7: #{tpu_custom_call.1} parent=1 // loop_footer_branch
      %15 = sbr.rel target = $region3
    $region8: #{tpu_custom_call.1} parent=1 // loop_exit
      _
    %1418 = vsyncpa [#allocation3], 1
    %s1419 = scalar_lea.sflag [#allocation3], 1
    %1420 = vsyncpa %s1419, 1

</llo_original>
